<compile_context>
chip_gen: v5e
topology: v5e:2x2
jax: 0.10.0
libtpu: 0.0.40
codegen_flags: <defaults>
</compile_context>

<pallas_src>
import functools

import jax
import jax.numpy as jnp
from jax.experimental import pallas as pl
from jax.experimental.pallas import tpu as pltpu

LANE = 128      # lane width: output columns are padded to multiples of this
TM_MAX = 512    # patch-matrix rows per grid step (safe for v7x's 64 MiB VMEM)
TK_MAX = 1024   # contraction size handled in a single K step
TN_MAX = 512    # output-column tile


def _round_up(x, m):
    return ((x + m - 1) // m) * m


def _pad_n(n):
    """Lane-dense output width: multiple of 128, minimizing zero columns."""
    n_pad = _round_up(n, LANE)
    if n_pad <= TN_MAX:
        return n_pad
    return min(_round_up(n, t) for t in range(LANE, TN_MAX + 1, LANE))


def _choose_tile(n, max_t):
    """Largest multiple of LANE dividing n (n % LANE == 0) that is <= max_t."""
    if n <= max_t:
        return n
    best = LANE
    for t in range(LANE, max_t + 1, LANE):
        if n % t == 0:
            best = t
    return best


def _choose_tm(m):
    """Row tile: multiple of 16 (bf16 sublane packing); aim for >=2 M-tiles
    when the layer is big enough so both v7x TensorCores get work."""
    if m <= 32:
        return _round_up(m, 16)
    if m <= TM_MAX:
        return _round_up((m + 1) // 2, 16)
    return TM_MAX


# ----------------------------- Pallas kernels --------------------------------
def _matmul_shift_kernel(a_ref, b_ref, shift_ref, o_ref):
    """Single-K-step fast path: bf16 MXU matmul (f32 math) + per-column shift."""
    o_ref[...] = (jnp.dot(a_ref[...], b_ref[...],
                          preferred_element_type=jnp.float32)
                  + shift_ref[...]).astype(o_ref.dtype)


def _matmul_shift_acc_kernel(a_ref, b_ref, shift_ref, o_ref, acc_ref):
    """Multi-K-step path with f32 VMEM accumulator (only for K > TK_MAX)."""
    @pl.when(pl.program_id(2) == 0)
    def _():
        acc_ref[...] = jnp.zeros_like(acc_ref)

    acc_ref[...] += jnp.dot(a_ref[...], b_ref[...],
                            preferred_element_type=jnp.float32)

    @pl.when(pl.program_id(2) == pl.num_programs(2) - 1)
    def _():
        o_ref[...] = (acc_ref[...] + shift_ref[...]).astype(o_ref.dtype)


def fused_matmul(a, b, shift, *, out_dtype):
    """(M, K) @ (K, N) + shift.  N must be a multiple of 128; K is arbitrary."""
    M, K = a.shape
    K2, N = b.shape
    assert K == K2 and N % LANE == 0
    assert shift.shape == (1, N)

    tm = _choose_tm(M)
    m_pad = _round_up(M, tm)
    if m_pad != M:
        a = jnp.pad(a, ((0, m_pad - M), (0, 0)))
    tn = _choose_tile(N, TN_MAX)

    if K <= TK_MAX:
        # One K step: no accumulator scratch, no init/finalize, no K padding of
        # either operand (full-extent K blocks are legal for any K).
        out = pl.pallas_call(
            _matmul_shift_kernel,
            out_shape=jax.ShapeDtypeStruct((m_pad, N), out_dtype),
            grid_spec=pltpu.PrefetchScalarGridSpec(
                num_scalar_prefetch=0,
                grid=(m_pad // tm, N // tn),
                in_specs=[
                    pl.BlockSpec((tm, K), lambda i, j: (i, 0)),
                    pl.BlockSpec((K, tn), lambda i, j: (0, j)),
                    pl.BlockSpec((1, tn), lambda i, j: (0, j)),
                ],
                out_specs=pl.BlockSpec((tm, tn), lambda i, j: (i, j)),
            ),
            compiler_params=pltpu.CompilerParams(
                dimension_semantics=("parallel", "parallel"),
                vmem_limit_bytes=32 * 1024 * 1024,
            ),
        )(a, b, shift)
    else:
        k_pad = _round_up(K, LANE)
        tk = _choose_tile(k_pad, TK_MAX)
        k_pad = _round_up(K, tk)
        if k_pad != K:
            a = jnp.pad(a, ((0, 0), (0, k_pad - K)))
            b = jnp.pad(b, ((0, k_pad - K), (0, 0)))
        out = pl.pallas_call(
            _matmul_shift_acc_kernel,
            out_shape=jax.ShapeDtypeStruct((m_pad, N), out_dtype),
            grid_spec=pltpu.PrefetchScalarGridSpec(
                num_scalar_prefetch=0,
                grid=(m_pad // tm, N // tn, k_pad // tk),
                in_specs=[
                    pl.BlockSpec((tm, tk), lambda i, j, k: (i, k)),
                    pl.BlockSpec((tk, tn), lambda i, j, k: (k, j)),
                    pl.BlockSpec((1, tn), lambda i, j, k: (0, j)),
                ],
                out_specs=pl.BlockSpec((tm, tn), lambda i, j, k: (i, j)),
                scratch_shapes=[pltpu.VMEM((tm, tn), jnp.float32)],
            ),
            compiler_params=pltpu.CompilerParams(
                dimension_semantics=("parallel", "parallel", "arbitrary"),
                vmem_limit_bytes=32 * 1024 * 1024,
            ),
        )(a, b, shift)
    return out[:M] if m_pad != M else out


# ------------------------------ conv helpers ---------------------------------
def _im2col(x_nhwc, k, stride, pad):
    """bf16 patch matrix (M, k*k*C), no K padding.
    `x_nhwc` must already carry the layer's pre-activation (activation happens
    before padding, exactly as in the PyTorch module)."""
    N, H, W, C = x_nhwc.shape
    xp = jnp.pad(x_nhwc, ((0, 0), (pad, pad), (pad, pad), (0, 0)))
    Ho = (H + 2 * pad - k) // stride + 1
    Wo = (W + 2 * pad - k) // stride + 1
    cols = []
    for kh in range(k):
        for kw in range(k):
            cols.append(xp[:, kh:kh + stride * (Ho - 1) + 1:stride,
                            kw:kw + stride * (Wo - 1) + 1:stride, :])
    patches = jnp.stack(cols, axis=3).astype(jnp.bfloat16)   # (N,Ho,Wo,k*k,C)
    return patches.reshape(N * Ho * Wo, k * k * C), (N, Ho, Wo)


def conv2d(x_nhwc, w_kc, shift, cout, *, k, stride, pad, out_dtype=jnp.bfloat16):
    """Conv with a prepared (k*k*Cin, N_pad) bf16 weight; returns (N,Ho,Wo,cout)."""
    K, N_pad = w_kc.shape
    patches, (N, Ho, Wo) = _im2col(x_nhwc, k, stride, pad)
    assert patches.shape[1] == K
    out = fused_matmul(patches, w_kc, shift, out_dtype=out_dtype)
    if cout != N_pad:
        out = out[:, :cout]
    return out.reshape(N, Ho, Wo, cout)


def conv_transpose2d_up(x_nhwc, w_kc, shift, cout):
    """ConvTranspose2d(k=4,s=2,p=1,bias=False)+BN as a 3x3 stride-1 conv with
    4*cout phase columns followed by a pixel shuffle (depth-to-space by 2)."""
    N, H, W, _ = x_nhwc.shape
    y = conv2d(x_nhwc, w_kc, shift, 4 * cout, k=3, stride=1, pad=1)
    y = y.reshape(N, H, W, 2, 2, cout)
    y = jnp.transpose(y, (0, 1, 3, 2, 4, 5)).reshape(N, 2 * H, 2 * W, cout)
    return y


# --------------------------- weight preparation -------------------------------
def _prep_conv_weight(w_oihw, scale):
    """(Cout,Cin,kh,kw) f32 -> matmul-ready bf16 (kh*kw*Cin, N_pad), BN scale
    folded into the columns.  K is NOT padded (full-K kernel blocks)."""
    cout, cin, kh, kw = w_oihw.shape
    w = jnp.transpose(w_oihw, (2, 3, 1, 0)).reshape(kh * kw * cin, cout)
    w = w * scale[None, :]
    n_pad = _pad_n(cout)
    w = jnp.pad(w, ((0, 0), (0, n_pad - cout)))
    return w.astype(jnp.bfloat16), n_pad


def _prep_convtranspose_weight(w_iohw, scale):
    """ConvTranspose2d(4,2,1) weight (Cin,Cout,4,4) -> combined pixel-shuffle
    3x3 conv weight of shape (9*Cin, N_pad = pad(4*Cout)).
    Phase (ah,aw) of output pixel (2m+ah, 2n+aw) uses tap (dh,dw) of the 3x3
    window iff kh = 3+ah-2*dh and kw = 3+aw-2*dw are valid kernel indices."""
    cin, cout = w_iohw.shape[0], w_iohw.shape[1]
    wc = jnp.zeros((3, 3, cin, 2, 2, cout), jnp.float32)
    for dh in range(3):
        for dw in range(3):
            for ah in range(2):
                for aw in range(2):
                    kh = 3 + ah - 2 * dh
                    kw = 3 + aw - 2 * dw
                    if 0 <= kh < 4 and 0 <= kw < 4:
                        wc = wc.at[dh, dw, :, ah, aw, :].set(w_iohw[:, :, kh, kw])
    wc = (wc * scale[None, None, None, None, None, :]).reshape(9 * cin, 4 * cout)
    n_pad = _pad_n(4 * cout)
    wc = jnp.pad(wc, ((0, 0), (0, n_pad - 4 * cout)))
    return wc.astype(jnp.bfloat16), n_pad


# ------------------------------ Generator ------------------------------------
def init_generator_params(key, num_down, input_ch, ngf, output_ch):
    eps = 1e-5
    bn_scale = 1.0 / (1.0 + eps) ** 0.5   # eval-mode BN with default running stats
    params = {"down": [], "up": []}

    in_ch, out_ch = input_ch, ngf
    for ii in range(num_down):
        key, sub = jax.random.split(key)
        w = jax.random.normal(sub, (out_ch, in_ch, 4, 4), jnp.float32) * 0.05
        has_bn = (ii != 0) and (ii != num_down - 1)
        scale = jnp.full((out_ch,), bn_scale if has_bn else 1.0, jnp.float32)
        w_prep, n_pad = _prep_conv_weight(w, scale)
        params["down"].append(dict(w=w_prep,
                                   shift=jnp.zeros((1, n_pad), jnp.float32),
                                   cout=out_ch))
        in_ch, out_ch = out_ch, out_ch * 2

    bn_ch = ngf * 2 ** (num_down - 1)
    in_ch, out_ch = bn_ch, bn_ch // 2
    for ii in range(num_down):
        key, sub = jax.random.split(key)
        # ConvTranspose2d weight layout: (Cin, Cout, kH, kW), bias=False
        w = jax.random.normal(sub, (in_ch, out_ch, 4, 4), jnp.float32) * 0.05
        scale = jnp.full((out_ch,), bn_scale, jnp.float32)
        w_prep, n_pad = _prep_convtranspose_weight(w, scale)
        params["up"].append(dict(w=w_prep,
                                 shift=jnp.zeros((1, n_pad), jnp.float32),
                                 cout=out_ch))
        if ii > 0:
            in_ch = in_ch // 2
        out_ch = out_ch // 2

    key, sub1, sub2 = jax.random.split(key, 3)
    w_last = jax.random.normal(sub1, (output_ch, out_ch * 2, 3, 3), jnp.float32) * 0.05
    b_last = jax.random.normal(sub2, (output_ch,), jnp.float32) * 0.05
    w_prep, n_pad = _prep_conv_weight(w_last, jnp.ones((output_ch,), jnp.float32))
    shift_last = jnp.zeros((1, n_pad), jnp.float32).at[0, :output_ch].set(b_last)
    params["last"] = dict(w=w_prep, shift=shift_last, cout=output_ch)
    return params


def generator_forward(params, x_nchw, *, num_down):
    x = jnp.transpose(x_nchw, (0, 2, 3, 1)).astype(jnp.bfloat16)   # NCHW -> NHWC
    skips = []
    for ii in range(num_down):
        p = params["down"][ii]
        # LeakyReLU(0.2) pre-activation (skipped for the first down block),
        # applied once to the layer input, not k*k times to the patches.
        xin = jnp.where(x > 0, x, 0.2 * x) if ii > 0 else x
        x = conv2d(xin, p["w"], p["shift"], p["cout"], k=4, stride=2, pad=1)
        skips.append(x)

    inp = skips[-1]
    out = None
    for ii in range(num_down):
        p = params["up"][ii]
        # TODO(synk): Dropout(0.5) in the middle up blocks is identity in eval mode.
        out = conv_transpose2d_up(jnp.maximum(inp, 0), p["w"], p["shift"], p["cout"])
        if ii < num_down - 1:
            inp = jnp.concatenate([out, skips[num_down - 2 - ii]], axis=-1)

    p = params["last"]
    out = conv2d(jnp.maximum(out, 0), p["w"], p["shift"], p["cout"],
                 k=3, stride=1, pad=1)
    # tanh in f32 on the 3 real channels only (not on 128 padded lanes in-kernel).
    out = jnp.tanh(out.astype(jnp.float32))
    return jnp.transpose(out, (0, 3, 1, 2))                        # NHWC -> NCHW


if __name__ == "__main__":
    # opt: num_down=3, input_ch=3, ngf=8, output_ch=3
    num_down, input_ch, ngf, output_ch = 3, 3, 8, 3
    N, H, W = 2, 16, 16

    key = jax.random.PRNGKey(0)
    kx, kp = jax.random.split(key)
    x = jax.random.normal(kx, (N, input_ch, H, W), jnp.float32)
    params = init_generator_params(kp, num_down, input_ch, ngf, output_ch)

    # Weights are prepared once at init; the whole forward is jitted so all
    # inter-layer glue (activation, im2col slicing, concat, pixel shuffle) fuses.
    fwd = jax.jit(functools.partial(generator_forward, params, num_down=num_down))
    y = fwd(x)
    jax.block_until_ready(y)
    assert y.shape == (N, output_ch, H, W), y.shape
    assert bool(jnp.all(jnp.isfinite(y)))
    print("KERNEL_OK")
</pallas_src>

<mosaic_0001>
module attributes {stable_mosaic.version = 11 : i64} {
  func.func @_matmul_shift_kernel(%arg0: i32, %arg1: i32, %arg2: memref<64x48xbf16, #tpu.memory_space<vmem>>, %arg3: memref<48x128xbf16, #tpu.memory_space<vmem>>, %arg4: memref<1x128xf32, #tpu.memory_space<vmem>>, %arg5: memref<64x128xbf16, #tpu.memory_space<vmem>>) attributes {dimension_semantics = [#tpu.dimension_semantics<parallel>, #tpu.dimension_semantics<parallel>], iteration_bounds = array<i64: 2, 1>, scalar_prefetch = 0 : i64, scratch_operands = 0 : i64, tpu.core_type = #tpu.core_type<tc>, window_params = [{transform_indices = @transform_0, window_bounds = array<i64: 64, 48>}, {transform_indices = @transform_1, window_bounds = array<i64: 48, 128>}, {transform_indices = @transform_2, window_bounds = array<i64: 1, 128>}, {transform_indices = @transform_3, window_bounds = array<i64: 64, 128>}]} {
    %c0 = arith.constant 0 : index
    %c0_0 = arith.constant 0 : index
    %0 = vector.load %arg2[%c0, %c0_0] : memref<64x48xbf16, #tpu.memory_space<vmem>>, vector<64x48xbf16>
    %c0_1 = arith.constant 0 : index
    %c0_2 = arith.constant 0 : index
    %1 = vector.load %arg3[%c0_1, %c0_2] : memref<48x128xbf16, #tpu.memory_space<vmem>>, vector<48x128xbf16>
    %cst = arith.constant dense<0.000000e+00> : vector<64x128xf32>
    %2 = tpu.matmul %0, %1, %cst {dimension_numbers = #tpu.dot_dimension_numbers<[1], [0], [0], [1], [0, 0, 1, 1], [], []>} : vector<64x48xbf16>, vector<48x128xbf16>, vector<64x128xf32> -> vector<64x128xf32>
    %c0_3 = arith.constant 0 : index
    %c0_4 = arith.constant 0 : index
    %3 = vector.load %arg4[%c0_3, %c0_4] : memref<1x128xf32, #tpu.memory_space<vmem>>, vector<1x128xf32>
    %4 = vector.broadcast %3 : vector<1x128xf32> to vector<64x128xf32>
    %5 = arith.addf %2, %4 : vector<64x128xf32>
    %6 = arith.truncf %5 : vector<64x128xf32> to vector<64x128xbf16>
    %c0_5 = arith.constant 0 : index
    %c0_6 = arith.constant 0 : index
    %7 = vector.load %arg5[%c0_5, %c0_6] : memref<64x128xbf16, #tpu.memory_space<vmem>>, vector<64x128xbf16>
    tpu.vector_store %arg5[%c0_5, %c0_6], %6 {strides = array<i32>} : memref<64x128xbf16, #tpu.memory_space<vmem>>, vector<64x128xbf16>,
    return
  }
  func.func @transform_0(%arg0: i32, %arg1: i32) -> (i32, i32) {
    %c0_i32 = arith.constant 0 : i32
    %c0_i32_0 = arith.constant 0 : i32
    return %arg0, %c0_i32 : i32, i32
  }
  func.func @transform_1(%arg0: i32, %arg1: i32) -> (i32, i32) {
    %c0_i32 = arith.constant 0 : i32
    %c0_i32_0 = arith.constant 0 : i32
    return %c0_i32, %arg1 : i32, i32
  }
  func.func @transform_2(%arg0: i32, %arg1: i32) -> (i32, i32) {
    %c0_i32 = arith.constant 0 : i32
    %c0_i32_0 = arith.constant 0 : i32
    return %c0_i32, %arg1 : i32, i32
  }
  func.func @transform_3(%arg0: i32, %arg1: i32) -> (i32, i32) {
    %c0_i32 = arith.constant 0 : i32
    return %arg0, %arg1 : i32, i32
  }
}

module attributes {stable_mosaic.version = 11 : i64} {
  func.func @_matmul_shift_kernel(%arg0: i32, %arg1: i32, %arg2: memref<32x128xbf16, #tpu.memory_space<vmem>>, %arg3: memref<128x128xbf16, #tpu.memory_space<vmem>>, %arg4: memref<1x128xf32, #tpu.memory_space<vmem>>, %arg5: memref<32x128xbf16, #tpu.memory_space<vmem>>) attributes {dimension_semantics = [#tpu.dimension_semantics<parallel>, #tpu.dimension_semantics<parallel>], iteration_bounds = array<i64: 1, 1>, scalar_prefetch = 0 : i64, scratch_operands = 0 : i64, tpu.core_type = #tpu.core_type<tc>, window_params = [{transform_indices = @transform_0, window_bounds = array<i64: 32, 128>}, {transform_indices = @transform_1, window_bounds = array<i64: 128, 128>}, {transform_indices = @transform_2, window_bounds = array<i64: 1, 128>}, {transform_indices = @transform_3, window_bounds = array<i64: 32, 128>}]} {
    %c0 = arith.constant 0 : index
    %c0_0 = arith.constant 0 : index
    %0 = vector.load %arg2[%c0, %c0_0] : memref<32x128xbf16, #tpu.memory_space<vmem>>, vector<32x128xbf16>
    %c0_1 = arith.constant 0 : index
    %c0_2 = arith.constant 0 : index
    %1 = vector.load %arg3[%c0_1, %c0_2] : memref<128x128xbf16, #tpu.memory_space<vmem>>, vector<128x128xbf16>
    %cst = arith.constant dense<0.000000e+00> : vector<32x128xf32>
    %2 = tpu.matmul %0, %1, %cst {dimension_numbers = #tpu.dot_dimension_numbers<[1], [0], [0], [1], [0, 0, 1, 1], [], []>} : vector<32x128xbf16>, vector<128x128xbf16>, vector<32x128xf32> -> vector<32x128xf32>
    %c0_3 = arith.constant 0 : index
    %c0_4 = arith.constant 0 : index
    %3 = vector.load %arg4[%c0_3, %c0_4] : memref<1x128xf32, #tpu.memory_space<vmem>>, vector<1x128xf32>
    %4 = vector.broadcast %3 : vector<1x128xf32> to vector<32x128xf32>
    %5 = arith.addf %2, %4 : vector<32x128xf32>
    %6 = arith.truncf %5 : vector<32x128xf32> to vector<32x128xbf16>
    %c0_5 = arith.constant 0 : index
    %c0_6 = arith.constant 0 : index
    %7 = vector.load %arg5[%c0_5, %c0_6] : memref<32x128xbf16, #tpu.memory_space<vmem>>, vector<32x128xbf16>
    tpu.vector_store %arg5[%c0_5, %c0_6], %6 {strides = array<i32>} : memref<32x128xbf16, #tpu.memory_space<vmem>>, vector<32x128xbf16>,
    return
  }
  func.func @transform_0(%arg0: i32, %arg1: i32) -> (i32, i32) {
    %c0_i32 = arith.constant 0 : i32
    %c0_i32_0 = arith.constant 0 : i32
    return %arg0, %c0_i32 : i32, i32
  }
  func.func @transform_1(%arg0: i32, %arg1: i32) -> (i32, i32) {
    %c0_i32 = arith.constant 0 : i32
    %c0_i32_0 = arith.constant 0 : i32
    return %c0_i32, %arg1 : i32, i32
  }
  func.func @transform_2(%arg0: i32, %arg1: i32) -> (i32, i32) {
    %c0_i32 = arith.constant 0 : i32
    %c0_i32_0 = arith.constant 0 : i32
    return %c0_i32, %arg1 : i32, i32
  }
  func.func @transform_3(%arg0: i32, %arg1: i32) -> (i32, i32) {
    %c0_i32 = arith.constant 0 : i32
    return %arg0, %arg1 : i32, i32
  }
}

module attributes {stable_mosaic.version = 11 : i64} {
  func.func @_matmul_shift_kernel(%arg0: i32, %arg1: i32, %arg2: memref<16x256xbf16, #tpu.memory_space<vmem>>, %arg3: memref<256x128xbf16, #tpu.memory_space<vmem>>, %arg4: memref<1x128xf32, #tpu.memory_space<vmem>>, %arg5: memref<16x128xbf16, #tpu.memory_space<vmem>>) attributes {dimension_semantics = [#tpu.dimension_semantics<parallel>, #tpu.dimension_semantics<parallel>], iteration_bounds = array<i64: 1, 1>, scalar_prefetch = 0 : i64, scratch_operands = 0 : i64, tpu.core_type = #tpu.core_type<tc>, window_params = [{transform_indices = @transform_0, window_bounds = array<i64: 16, 256>}, {transform_indices = @transform_1, window_bounds = array<i64: 256, 128>}, {transform_indices = @transform_2, window_bounds = array<i64: 1, 128>}, {transform_indices = @transform_3, window_bounds = array<i64: 16, 128>}]} {
    %c0 = arith.constant 0 : index
    %c0_0 = arith.constant 0 : index
    %0 = vector.load %arg2[%c0, %c0_0] : memref<16x256xbf16, #tpu.memory_space<vmem>>, vector<16x256xbf16>
    %c0_1 = arith.constant 0 : index
    %c0_2 = arith.constant 0 : index
    %1 = vector.load %arg3[%c0_1, %c0_2] : memref<256x128xbf16, #tpu.memory_space<vmem>>, vector<256x128xbf16>
    %cst = arith.constant dense<0.000000e+00> : vector<16x128xf32>
    %2 = tpu.matmul %0, %1, %cst {dimension_numbers = #tpu.dot_dimension_numbers<[1], [0], [0], [1], [0, 0, 1, 1], [], []>} : vector<16x256xbf16>, vector<256x128xbf16>, vector<16x128xf32> -> vector<16x128xf32>
    %c0_3 = arith.constant 0 : index
    %c0_4 = arith.constant 0 : index
    %3 = vector.load %arg4[%c0_3, %c0_4] : memref<1x128xf32, #tpu.memory_space<vmem>>, vector<1x128xf32>
    %4 = vector.broadcast %3 : vector<1x128xf32> to vector<16x128xf32>
    %5 = arith.addf %2, %4 : vector<16x128xf32>
    %6 = arith.truncf %5 : vector<16x128xf32> to vector<16x128xbf16>
    %c0_5 = arith.constant 0 : index
    %c0_6 = arith.constant 0 : index
    %7 = vector.load %arg5[%c0_5, %c0_6] : memref<16x128xbf16, #tpu.memory_space<vmem>>, vector<16x128xbf16>
    tpu.vector_store %arg5[%c0_5, %c0_6], %6 {strides = array<i32>} : memref<16x128xbf16, #tpu.memory_space<vmem>>, vector<16x128xbf16>,
    return
  }
  func.func @transform_0(%arg0: i32, %arg1: i32) -> (i32, i32) {
    %c0_i32 = arith.constant 0 : i32
    %c0_i32_0 = arith.constant 0 : i32
    return %arg0, %c0_i32 : i32, i32
  }
  func.func @transform_1(%arg0: i32, %arg1: i32) -> (i32, i32) {
    %c0_i32 = arith.constant 0 : i32
    %c0_i32_0 = arith.constant 0 : i32
    return %c0_i32, %arg1 : i32, i32
  }
  func.func @transform_2(%arg0: i32, %arg1: i32) -> (i32, i32) {
    %c0_i32 = arith.constant 0 : i32
    %c0_i32_0 = arith.constant 0 : i32
    return %c0_i32, %arg1 : i32, i32
  }
  func.func @transform_3(%arg0: i32, %arg1: i32) -> (i32, i32) {
    %c0_i32 = arith.constant 0 : i32
    return %arg0, %arg1 : i32, i32
  }
}

module attributes {stable_mosaic.version = 11 : i64} {
  func.func @_matmul_shift_kernel(%arg0: i32, %arg1: i32, %arg2: memref<16x288xbf16, #tpu.memory_space<vmem>>, %arg3: memref<288x128xbf16, #tpu.memory_space<vmem>>, %arg4: memref<1x128xf32, #tpu.memory_space<vmem>>, %arg5: memref<16x128xbf16, #tpu.memory_space<vmem>>) attributes {dimension_semantics = [#tpu.dimension_semantics<parallel>, #tpu.dimension_semantics<parallel>], iteration_bounds = array<i64: 1, 1>, scalar_prefetch = 0 : i64, scratch_operands = 0 : i64, tpu.core_type = #tpu.core_type<tc>, window_params = [{transform_indices = @transform_0, window_bounds = array<i64: 16, 288>}, {transform_indices = @transform_1, window_bounds = array<i64: 288, 128>}, {transform_indices = @transform_2, window_bounds = array<i64: 1, 128>}, {transform_indices = @transform_3, window_bounds = array<i64: 16, 128>}]} {
    %c0 = arith.constant 0 : index
    %c0_0 = arith.constant 0 : index
    %0 = vector.load %arg2[%c0, %c0_0] : memref<16x288xbf16, #tpu.memory_space<vmem>>, vector<16x288xbf16>
    %c0_1 = arith.constant 0 : index
    %c0_2 = arith.constant 0 : index
    %1 = vector.load %arg3[%c0_1, %c0_2] : memref<288x128xbf16, #tpu.memory_space<vmem>>, vector<288x128xbf16>
    %cst = arith.constant dense<0.000000e+00> : vector<16x128xf32>
    %2 = tpu.matmul %0, %1, %cst {dimension_numbers = #tpu.dot_dimension_numbers<[1], [0], [0], [1], [0, 0, 1, 1], [], []>} : vector<16x288xbf16>, vector<288x128xbf16>, vector<16x128xf32> -> vector<16x128xf32>
    %c0_3 = arith.constant 0 : index
    %c0_4 = arith.constant 0 : index
    %3 = vector.load %arg4[%c0_3, %c0_4] : memref<1x128xf32, #tpu.memory_space<vmem>>, vector<1x128xf32>
    %4 = vector.broadcast %3 : vector<1x128xf32> to vector<16x128xf32>
    %5 = arith.addf %2, %4 : vector<16x128xf32>
    %6 = arith.truncf %5 : vector<16x128xf32> to vector<16x128xbf16>
    %c0_5 = arith.constant 0 : index
    %c0_6 = arith.constant 0 : index
    %7 = vector.load %arg5[%c0_5, %c0_6] : memref<16x128xbf16, #tpu.memory_space<vmem>>, vector<16x128xbf16>
    tpu.vector_store %arg5[%c0_5, %c0_6], %6 {strides = array<i32>} : memref<16x128xbf16, #tpu.memory_space<vmem>>, vector<16x128xbf16>,
    return
  }
  func.func @transform_0(%arg0: i32, %arg1: i32) -> (i32, i32) {
    %c0_i32 = arith.constant 0 : i32
    %c0_i32_0 = arith.constant 0 : i32
    return %arg0, %c0_i32 : i32, i32
  }
  func.func @transform_1(%arg0: i32, %arg1: i32) -> (i32, i32) {
    %c0_i32 = arith.constant 0 : i32
    %c0_i32_0 = arith.constant 0 : i32
    return %c0_i32, %arg1 : i32, i32
  }
  func.func @transform_2(%arg0: i32, %arg1: i32) -> (i32, i32) {
    %c0_i32 = arith.constant 0 : i32
    %c0_i32_0 = arith.constant 0 : i32
    return %c0_i32, %arg1 : i32, i32
  }
  func.func @transform_3(%arg0: i32, %arg1: i32) -> (i32, i32) {
    %c0_i32 = arith.constant 0 : i32
    return %arg0, %arg1 : i32, i32
  }
}

module attributes {stable_mosaic.version = 11 : i64} {
  func.func @_matmul_shift_kernel(%arg0: i32, %arg1: i32, %arg2: memref<32x288xbf16, #tpu.memory_space<vmem>>, %arg3: memref<288x128xbf16, #tpu.memory_space<vmem>>, %arg4: memref<1x128xf32, #tpu.memory_space<vmem>>, %arg5: memref<32x128xbf16, #tpu.memory_space<vmem>>) attributes {dimension_semantics = [#tpu.dimension_semantics<parallel>, #tpu.dimension_semantics<parallel>], iteration_bounds = array<i64: 1, 1>, scalar_prefetch = 0 : i64, scratch_operands = 0 : i64, tpu.core_type = #tpu.core_type<tc>, window_params = [{transform_indices = @transform_0, window_bounds = array<i64: 32, 288>}, {transform_indices = @transform_1, window_bounds = array<i64: 288, 128>}, {transform_indices = @transform_2, window_bounds = array<i64: 1, 128>}, {transform_indices = @transform_3, window_bounds = array<i64: 32, 128>}]} {
    %c0 = arith.constant 0 : index
    %c0_0 = arith.constant 0 : index
    %0 = vector.load %arg2[%c0, %c0_0] : memref<32x288xbf16, #tpu.memory_space<vmem>>, vector<32x288xbf16>
    %c0_1 = arith.constant 0 : index
    %c0_2 = arith.constant 0 : index
    %1 = vector.load %arg3[%c0_1, %c0_2] : memref<288x128xbf16, #tpu.memory_space<vmem>>, vector<288x128xbf16>
    %cst = arith.constant dense<0.000000e+00> : vector<32x128xf32>
    %2 = tpu.matmul %0, %1, %cst {dimension_numbers = #tpu.dot_dimension_numbers<[1], [0], [0], [1], [0, 0, 1, 1], [], []>} : vector<32x288xbf16>, vector<288x128xbf16>, vector<32x128xf32> -> vector<32x128xf32>
    %c0_3 = arith.constant 0 : index
    %c0_4 = arith.constant 0 : index
    %3 = vector.load %arg4[%c0_3, %c0_4] : memref<1x128xf32, #tpu.memory_space<vmem>>, vector<1x128xf32>
    %4 = vector.broadcast %3 : vector<1x128xf32> to vector<32x128xf32>
    %5 = arith.addf %2, %4 : vector<32x128xf32>
    %6 = arith.truncf %5 : vector<32x128xf32> to vector<32x128xbf16>
    %c0_5 = arith.constant 0 : index
    %c0_6 = arith.constant 0 : index
    %7 = vector.load %arg5[%c0_5, %c0_6] : memref<32x128xbf16, #tpu.memory_space<vmem>>, vector<32x128xbf16>
    tpu.vector_store %arg5[%c0_5, %c0_6], %6 {strides = array<i32>} : memref<32x128xbf16, #tpu.memory_space<vmem>>, vector<32x128xbf16>,
    return
  }
  func.func @transform_0(%arg0: i32, %arg1: i32) -> (i32, i32) {
    %c0_i32 = arith.constant 0 : i32
    %c0_i32_0 = arith.constant 0 : i32
    return %arg0, %c0_i32 : i32, i32
  }
  func.func @transform_1(%arg0: i32, %arg1: i32) -> (i32, i32) {
    %c0_i32 = arith.constant 0 : i32
    %c0_i32_0 = arith.constant 0 : i32
    return %c0_i32, %arg1 : i32, i32
  }
  func.func @transform_2(%arg0: i32, %arg1: i32) -> (i32, i32) {
    %c0_i32 = arith.constant 0 : i32
    %c0_i32_0 = arith.constant 0 : i32
    return %c0_i32, %arg1 : i32, i32
  }
  func.func @transform_3(%arg0: i32, %arg1: i32) -> (i32, i32) {
    %c0_i32 = arith.constant 0 : i32
    return %arg0, %arg1 : i32, i32
  }
}

module attributes {stable_mosaic.version = 11 : i64} {
  func.func @_matmul_shift_kernel(%arg0: i32, %arg1: i32, %arg2: memref<64x144xbf16, #tpu.memory_space<vmem>>, %arg3: memref<144x128xbf16, #tpu.memory_space<vmem>>, %arg4: memref<1x128xf32, #tpu.memory_space<vmem>>, %arg5: memref<64x128xbf16, #tpu.memory_space<vmem>>) attributes {dimension_semantics = [#tpu.dimension_semantics<parallel>, #tpu.dimension_semantics<parallel>], iteration_bounds = array<i64: 2, 1>, scalar_prefetch = 0 : i64, scratch_operands = 0 : i64, tpu.core_type = #tpu.core_type<tc>, window_params = [{transform_indices = @transform_0, window_bounds = array<i64: 64, 144>}, {transform_indices = @transform_1, window_bounds = array<i64: 144, 128>}, {transform_indices = @transform_2, window_bounds = array<i64: 1, 128>}, {transform_indices = @transform_3, window_bounds = array<i64: 64, 128>}]} {
    %c0 = arith.constant 0 : index
    %c0_0 = arith.constant 0 : index
    %0 = vector.load %arg2[%c0, %c0_0] : memref<64x144xbf16, #tpu.memory_space<vmem>>, vector<64x144xbf16>
    %c0_1 = arith.constant 0 : index
    %c0_2 = arith.constant 0 : index
    %1 = vector.load %arg3[%c0_1, %c0_2] : memref<144x128xbf16, #tpu.memory_space<vmem>>, vector<144x128xbf16>
    %cst = arith.constant dense<0.000000e+00> : vector<64x128xf32>
    %2 = tpu.matmul %0, %1, %cst {dimension_numbers = #tpu.dot_dimension_numbers<[1], [0], [0], [1], [0, 0, 1, 1], [], []>} : vector<64x144xbf16>, vector<144x128xbf16>, vector<64x128xf32> -> vector<64x128xf32>
    %c0_3 = arith.constant 0 : index
    %c0_4 = arith.constant 0 : index
    %3 = vector.load %arg4[%c0_3, %c0_4] : memref<1x128xf32, #tpu.memory_space<vmem>>, vector<1x128xf32>
    %4 = vector.broadcast %3 : vector<1x128xf32> to vector<64x128xf32>
    %5 = arith.addf %2, %4 : vector<64x128xf32>
    %6 = arith.truncf %5 : vector<64x128xf32> to vector<64x128xbf16>
    %c0_5 = arith.constant 0 : index
    %c0_6 = arith.constant 0 : index
    %7 = vector.load %arg5[%c0_5, %c0_6] : memref<64x128xbf16, #tpu.memory_space<vmem>>, vector<64x128xbf16>
    tpu.vector_store %arg5[%c0_5, %c0_6], %6 {strides = array<i32>} : memref<64x128xbf16, #tpu.memory_space<vmem>>, vector<64x128xbf16>,
    return
  }
  func.func @transform_0(%arg0: i32, %arg1: i32) -> (i32, i32) {
    %c0_i32 = arith.constant 0 : i32
    %c0_i32_0 = arith.constant 0 : i32
    return %arg0, %c0_i32 : i32, i32
  }
  func.func @transform_1(%arg0: i32, %arg1: i32) -> (i32, i32) {
    %c0_i32 = arith.constant 0 : i32
    %c0_i32_0 = arith.constant 0 : i32
    return %c0_i32, %arg1 : i32, i32
  }
  func.func @transform_2(%arg0: i32, %arg1: i32) -> (i32, i32) {
    %c0_i32 = arith.constant 0 : i32
    %c0_i32_0 = arith.constant 0 : i32
    return %c0_i32, %arg1 : i32, i32
  }
  func.func @transform_3(%arg0: i32, %arg1: i32) -> (i32, i32) {
    %c0_i32 = arith.constant 0 : i32
    return %arg0, %arg1 : i32, i32
  }
}

module attributes {stable_mosaic.version = 11 : i64} {
  func.func @_matmul_shift_kernel(%arg0: i32, %arg1: i32, %arg2: memref<256x36xbf16, #tpu.memory_space<vmem>>, %arg3: memref<36x128xbf16, #tpu.memory_space<vmem>>, %arg4: memref<1x128xf32, #tpu.memory_space<vmem>>, %arg5: memref<256x128xbf16, #tpu.memory_space<vmem>>) attributes {dimension_semantics = [#tpu.dimension_semantics<parallel>, #tpu.dimension_semantics<parallel>], iteration_bounds = array<i64: 2, 1>, scalar_prefetch = 0 : i64, scratch_operands = 0 : i64, tpu.core_type = #tpu.core_type<tc>, window_params = [{transform_indices = @transform_0, window_bounds = array<i64: 256, 36>}, {transform_indices = @transform_1, window_bounds = array<i64: 36, 128>}, {transform_indices = @transform_2, window_bounds = array<i64: 1, 128>}, {transform_indices = @transform_3, window_bounds = array<i64: 256, 128>}]} {
    %c0 = arith.constant 0 : index
    %c0_0 = arith.constant 0 : index
    %0 = vector.load %arg2[%c0, %c0_0] : memref<256x36xbf16, #tpu.memory_space<vmem>>, vector<256x36xbf16>
    %c0_1 = arith.constant 0 : index
    %c0_2 = arith.constant 0 : index
    %1 = vector.load %arg3[%c0_1, %c0_2] : memref<36x128xbf16, #tpu.memory_space<vmem>>, vector<36x128xbf16>
    %cst = arith.constant dense<0.000000e+00> : vector<256x128xf32>
    %2 = tpu.matmul %0, %1, %cst {dimension_numbers = #tpu.dot_dimension_numbers<[1], [0], [0], [1], [0, 0, 1, 1], [], []>} : vector<256x36xbf16>, vector<36x128xbf16>, vector<256x128xf32> -> vector<256x128xf32>
    %c0_3 = arith.constant 0 : index
    %c0_4 = arith.constant 0 : index
    %3 = vector.load %arg4[%c0_3, %c0_4] : memref<1x128xf32, #tpu.memory_space<vmem>>, vector<1x128xf32>
    %4 = vector.broadcast %3 : vector<1x128xf32> to vector<256x128xf32>
    %5 = arith.addf %2, %4 : vector<256x128xf32>
    %6 = arith.truncf %5 : vector<256x128xf32> to vector<256x128xbf16>
    %c0_5 = arith.constant 0 : index
    %c0_6 = arith.constant 0 : index
    %7 = vector.load %arg5[%c0_5, %c0_6] : memref<256x128xbf16, #tpu.memory_space<vmem>>, vector<256x128xbf16>
    tpu.vector_store %arg5[%c0_5, %c0_6], %6 {strides = array<i32>} : memref<256x128xbf16, #tpu.memory_space<vmem>>, vector<256x128xbf16>,
    return
  }
  func.func @transform_0(%arg0: i32, %arg1: i32) -> (i32, i32) {
    %c0_i32 = arith.constant 0 : i32
    %c0_i32_0 = arith.constant 0 : i32
    return %arg0, %c0_i32 : i32, i32
  }
  func.func @transform_1(%arg0: i32, %arg1: i32) -> (i32, i32) {
    %c0_i32 = arith.constant 0 : i32
    %c0_i32_0 = arith.constant 0 : i32
    return %c0_i32, %arg1 : i32, i32
  }
  func.func @transform_2(%arg0: i32, %arg1: i32) -> (i32, i32) {
    %c0_i32 = arith.constant 0 : i32
    %c0_i32_0 = arith.constant 0 : i32
    return %c0_i32, %arg1 : i32, i32
  }
  func.func @transform_3(%arg0: i32, %arg1: i32) -> (i32, i32) {
    %c0_i32 = arith.constant 0 : i32
    return %arg0, %arg1 : i32, i32
  }
}

</mosaic_0001>

<llo_original>
// kernel: generator_forward.7
$region0: #{generator_forward.7}
  #allocation0 [shape = 'u32[]', space=smem, size = 0x4, offset = 0x4, fixed_abs, tag = 'smem constant byte address 0x4 - core index']
  #allocation1 [shape = 'u32[72,128]{1,0:T(1,128)}', space=vmem, size = 0x9000, scoped, tag = 'internal scratch']
  %s0 = inlined_call_operand.vmem [shape: bf16[128,48], index: 0, kind: input, shape index: {}]
  %s1 = inlined_call_operand.vmem [shape: bf16[48,128], index: 1, kind: input, shape index: {}]
  %s2 = inlined_call_operand.vmem [shape: f32[1,128], index: 2, kind: input, shape index: {}]
  %s3 = inlined_call_operand.vmem [shape: bf16[128,128], index: 3, kind: output, shape index: {}]
  %s4 = sld [smem:[#allocation0]]
  $region45: #{generator_forward.7} parent=0
    _
  %s6 = ssub.s32 1, %s4
  %s7 = scalar_select 0, %s6, %s4
  loop: start=0, step=1, limit=4
  $region2: #{generator_forward.7} parent=0 // loop_pre_header
    _
  $region3: #{generator_forward.7} parent=0 // loop_header
    %s9 = sphi 0, %s13
    %p10 = scmp.ge.s32.totalorder %s9, 4
    %s16 = sphi 0, %s28
    %s17 = sphi 0, %s24
    %s18 = sphi 0, %s16
    %s19 = sphi 0, %s17
    %s20 = sphi 0, %s18
    %s21 = sphi 0, %s19
    %s31 = sphi 0, %s33
    %s34 = sphi 0, %s31
    %s35 = sphi 0, %s34
    %s51 = sphi 0, %s35
    %s57 = sphi 0, %s59
    %s60 = sphi 0, %s57
    %s61 = sphi 0, %s60
    %s77 = sphi 0, %s61
    %s83 = sphi 0, %s85
    %s86 = sphi 0, %s83
    %s87 = sphi 0, %s86
    %s103 = sphi 0, %s87
    %s111 = sphi 0, %s113
    %s114 = sphi 0, %s111
    %s115 = sphi 0, %s114
    %s131 = sphi 0, %s115
  $region4: #{generator_forward.7} parent=0 // loop_header_branch
    %12 = sbr.rel (%p10) target = $region8
  $region5: #{generator_forward.7} parent=0 // loop_body
    %s14 = ssub.s32 %s9, 1
    %s15 = ssub.s32 %s9, 2
    %s22 = sadd.s32 1, %s17
    %p23 = scmp.ge.s32.totalorder %s22, 1
    %s24 = scalar_select %p23, 0, %s22
    %s25 = sadd.s32 1, %s16
    %s26 = scalar_select %p23, %s25, %s16
    %p27 = scmp.ge.s32.totalorder %s26, 2
    %s28 = scalar_select %p27, 0, %s26
    %s29 = ssub.s32 %s16, %s28
    %p30 = scmp.eq.s32.totalorder %s29, 0
    %s32 = sadd.s32 %s31, 1
    %s33 = scalar_select %p30, %s31, %s32
    %p36 = pneg %p30
    %p37 = scmp.eq.s32.totalorder %s9, 1
    %p38 = por %p36, %p37
    %p39 = scmp.ne.s32.totalorder %s31, %s34
    %p40 = scmp.eq.s32.totalorder %s9, 0
    %p41 = por %p39, %p40
    %p42 = scmp.ne.s32.totalorder %s31, %s34
    %p43 = scmp.eq.s32.totalorder %s14, 1
    %p44 = por %p42, %p43
    %p45 = scmp.ne.s32.totalorder %s34, %s35
    %p46 = scmp.eq.s32.totalorder %s14, 0
    %p47 = por %p45, %p46
    %p48 = scmp.ne.s32.totalorder %s34, %s35
    %p49 = scmp.eq.s32.totalorder %s15, 1
    %p50 = por %p48, %p49
    %p52 = scmp.ne.s32.totalorder %s35, %s51
    %p53 = scmp.eq.s32.totalorder %s15, 0
    %p54 = por %p52, %p53
    %s55 = ssub.s32 %s17, %s24
    %p56 = scmp.eq.s32.totalorder %s55, 0
    %s58 = sadd.s32 %s57, 1
    %s59 = scalar_select %p56, %s57, %s58
    %p62 = pneg %p56
    %p63 = scmp.eq.s32.totalorder %s9, 1
    %p64 = por %p62, %p63
    %p65 = scmp.ne.s32.totalorder %s57, %s60
    %p66 = scmp.eq.s32.totalorder %s9, 0
    %p67 = por %p65, %p66
    %p68 = scmp.ne.s32.totalorder %s57, %s60
    %p69 = scmp.eq.s32.totalorder %s14, 1
    %p70 = por %p68, %p69
    %p71 = scmp.ne.s32.totalorder %s60, %s61
    %p72 = scmp.eq.s32.totalorder %s14, 0
    %p73 = por %p71, %p72
    %p74 = scmp.ne.s32.totalorder %s60, %s61
    %p75 = scmp.eq.s32.totalorder %s15, 1
    %p76 = por %p74, %p75
    %p78 = scmp.ne.s32.totalorder %s61, %s77
    %p79 = scmp.eq.s32.totalorder %s15, 0
    %p80 = por %p78, %p79
    %s81 = ssub.s32 %s17, %s24
    %p82 = scmp.eq.s32.totalorder %s81, 0
    %s84 = sadd.s32 %s83, 1
    %s85 = scalar_select %p82, %s83, %s84
    %p88 = pneg %p82
    %p89 = scmp.eq.s32.totalorder %s9, 1
    %p90 = por %p88, %p89
    %p91 = scmp.ne.s32.totalorder %s83, %s86
    %p92 = scmp.eq.s32.totalorder %s9, 0
    %p93 = por %p91, %p92
    %p94 = scmp.ne.s32.totalorder %s83, %s86
    %p95 = scmp.eq.s32.totalorder %s14, 1
    %p96 = por %p94, %p95
    %p97 = scmp.ne.s32.totalorder %s86, %s87
    %p98 = scmp.eq.s32.totalorder %s14, 0
    %p99 = por %p97, %p98
    %p100 = scmp.ne.s32.totalorder %s86, %s87
    %p101 = scmp.eq.s32.totalorder %s15, 1
    %p102 = por %p100, %p101
    %p104 = scmp.ne.s32.totalorder %s87, %s103
    %p105 = scmp.eq.s32.totalorder %s15, 0
    %p106 = por %p104, %p105
    %s107 = ssub.s32 %s16, %s28
    %s108 = ssub.s32 %s17, %s24
    %s109 = sor.u32 %s107, %s108
    %p110 = scmp.eq.s32.totalorder %s109, 0
    %s112 = sadd.s32 %s111, 1
    %s113 = scalar_select %p110, %s111, %s112
    %p116 = pneg %p110
    %p117 = scmp.eq.s32.totalorder %s9, 1
    %p118 = por %p116, %p117
    %p119 = scmp.ne.s32.totalorder %s111, %s114
    %p120 = scmp.eq.s32.totalorder %s9, 0
    %p121 = por %p119, %p120
    %p122 = scmp.ne.s32.totalorder %s111, %s114
    %p123 = scmp.eq.s32.totalorder %s14, 1
    %p124 = por %p122, %p123
    %p125 = scmp.ne.s32.totalorder %s114, %s115
    %p126 = scmp.eq.s32.totalorder %s14, 0
    %p127 = por %p125, %p126
    %p128 = scmp.ne.s32.totalorder %s114, %s115
    %p129 = scmp.eq.s32.totalorder %s15, 1
    %p130 = por %p128, %p129
    %p132 = scmp.ne.s32.totalorder %s115, %s131
    %p133 = scmp.eq.s32.totalorder %s15, 0
    %p134 = por %p132, %p133
    %p135 = scmp.le.s32.totalorder 1, %s9
    %p136 = scmp.lt.s32.totalorder %s9, 3
    %p137 = pnand %p135, %p136
    %p138 = pneg %p137
    // Predicated region
    $region9: #{generator_forward.7} parent=5 // pred_check
      _
    $region10: #{generator_forward.7} parent=5 // pred_check_branch
      %140 = sbr.rel (%p137) target = $region12
    $region11: #{generator_forward.7} parent=5 // pred_region
      %s141 = ssub.s32 %s9, 1
      // Predicated region
      $region13: #{generator_forward.7} parent=11 // pred_check
        %p142 = pneg %p73
      $region14: #{generator_forward.7} parent=11 // pred_check_branch
        %144 = sbr.rel (%p142) target = $region16
      $region15: #{generator_forward.7} parent=11 // pred_region
        %p145 = scmp.lt.s32.totalorder %s19, 0
        %s146 = scalar_select %p145, %s19, 0
        %s147 = smul.addr %s146, 4
        %s148 = scalar_lea.vmem %s1, %s147
      $region16: #{generator_forward.7} parent=11 // pred_fallthru
        _
      // Predicated region
      $region17: #{generator_forward.7} parent=11 // pred_check
        %p149 = pneg %p99
      $region18: #{generator_forward.7} parent=11 // pred_check_branch
        %151 = sbr.rel (%p149) target = $region20
      $region19: #{generator_forward.7} parent=11 // pred_region
        %p152 = scmp.lt.s32.totalorder %s19, 0
        %s153 = scalar_select %p152, %s19, 0
        %s154 = scalar_lea.vmem %s2, %s153
      $region20: #{generator_forward.7} parent=11 // pred_fallthru
        _
    $region12: #{generator_forward.7} parent=5 // pred_fallthru
      _
    %p155 = scmp.lt.s32.totalorder %s9, 2
    // Predicated region
    $region21: #{generator_forward.7} parent=5 // pred_check
      %p156 = pneg %p155
    $region22: #{generator_forward.7} parent=5 // pred_check_branch
      %158 = sbr.rel (%p156) target = $region24
    $region23: #{generator_forward.7} parent=5 // pred_region
      // Predicated region
      $region25: #{generator_forward.7} parent=23 // pred_check
        %p159 = pneg %p41
      $region26: #{generator_forward.7} parent=23 // pred_check_branch
        %161 = sbr.rel (%p159) target = $region28
      $region27: #{generator_forward.7} parent=23 // pred_region
        %s162 = smul.u32 8, %s16
        %p163 = scmp.lt.s32.totalorder %s162, 15
        %s164 = scalar_select %p163, %s162, 15
        %s165 = smul.addr %s164, 4
        %s166 = scalar_lea.vmem %s0, %s165
        %s167 = smul.u32 8, %s16
      $region28: #{generator_forward.7} parent=23 // pred_fallthru
        _
    $region24: #{generator_forward.7} parent=5 // pred_fallthru
      _
    %p168 = scmp.le.s32.totalorder 1, %s9
    %p169 = scmp.lt.s32.totalorder %s9, 3
    %p170 = pnand %p168, %p169
    %p171 = pneg %p170
    // Predicated region
    $region29: #{generator_forward.7} parent=5 // pred_check
      _
    $region30: #{generator_forward.7} parent=5 // pred_check_branch
      %173 = sbr.rel (%p170) target = $region32
    $region31: #{generator_forward.7} parent=5 // pred_region
      %s174 = ssub.s32 %s9, 1
      %s175 = smul.u32 8, %s18
      %p176 = scmp.lt.s32.totalorder %s175, 15
      %s177 = scalar_select %p176, %s175, 15
      %s178 = smul.addr %s177, 4
      %s179 = scalar_lea.vmem %s0, %s178
      %p180 = pneg %p47
      %p181 = pneg %p44
      %p182 = scmp.lt.s32.totalorder %s19, 0
      %s183 = scalar_select %p182, %s19, 0
      %s184 = smul.addr %s183, 4
      %s185 = scalar_lea.vmem %s1, %s184
      %p186 = pneg %p73
      %p187 = pneg %p70
      %p188 = scmp.lt.s32.totalorder %s19, 0
      %s189 = scalar_select %p188, %s19, 0
      %s190 = scalar_lea.vmem %s2, %s189
      %p191 = pneg %p99
      %p192 = pneg %p96
      %p193 = pneg %p127
      %p194 = pneg %p124
      %s195 = smul.u32 8, %s18
      %p196 = scmp.lt.s32.totalorder %s195, 15
      %s197 = scalar_select %p196, %s195, 15
      %p198 = scmp.lt.s32.totalorder %s19, 0
      %s199 = scalar_select %p198, %s19, 0
      %s200 = sadd.s32 %s199, %s197
      %s201 = smul.addr %s200, 4
      %s202 = scalar_lea.vmem %s3, %s201
      %s203 = smul.u32 8, %s18
      %p204 = scmp.lt.s32.totalorder %s203, 15
      %s205 = scalar_select %p204, %s203, 15
      %s206 = smul.addr %s205, 4
      %s207 = scalar_lea.vmem %s0, %s206
      %s208 = smul.u32 8, %s18
      %p209 = scmp.lt.s32.totalorder %s19, 0
      %s210 = scalar_select %p209, %s19, 0
      %s211 = smul.addr %s210, 4
      %s212 = scalar_lea.vmem %s1, %s211
      %p213 = scmp.lt.s32.totalorder %s19, 0
      %s214 = scalar_select %p213, %s19, 0
      %s215 = scalar_lea.vmem %s2, %s214
      %s216 = smul.u32 8, %s18
      %p217 = scmp.lt.s32.totalorder %s216, 15
      %s218 = scalar_select %p217, %s216, 15
      %p219 = scmp.lt.s32.totalorder %s19, 0
      %s220 = scalar_select %p219, %s19, 0
      %s221 = sadd.s32 %s220, %s218
      %s222 = smul.addr %s221, 4
      %s223 = scalar_lea.vmem %s3, %s222
      %s224 = smul.u32 8, %s18
      %v226 = vld [vmem:[%s207] sm:$0xf]
      %v227 = vld [vmem:[%s207 + $0x4] sm:$0xf]
      %v228 = vld [vmem:[%s207 + $0x8] sm:$0xf]
      %v229 = vld [vmem:[%s207 + $0xc] sm:$0xf]
      %v230 = vld [vmem:[%s207 + $0x10] sm:$0xf]
      %v231 = vld [vmem:[%s207 + $0x14] sm:$0xf]
      %v232 = vld [vmem:[%s207 + $0x18] sm:$0xf]
      %v233 = vld [vmem:[%s207 + $0x1c] sm:$0xf]
      %v234 = vld [vmem:[%s212] sm:$0xf]
      %v235 = vld [vmem:[%s212 + $0x4] sm:$0xf]
      %v236 = vld [vmem:[%s212 + $0x8] sm:$0xf]
      %v237 = vld [vmem:[%s212 + $0xc] sm:$0xf]
      %v238 = vld [vmem:[%s212 + $0x10] sm:$0xf]
      %v239 = vld [vmem:[%s212 + $0x14] sm:$0xf]
      %v240 = vld [vmem:[%s215] sm:$0x1]
      %v242 = vperm.slane %v240, 0
      %v252 = vunpack.c.l.b16 %v226
      %v253 = vunpack.c.l.b16 %v227
      %v254 = vunpack.c.l.b16 %v228
      %v255 = vunpack.c.l.b16 %v229
      %v256 = vunpack.c.l.b16 %v230
      %v257 = vunpack.c.l.b16 %v231
      %v258 = vunpack.c.l.b16 %v232
      %v259 = vunpack.c.l.b16 %v233
      %v260 = vpack.c.b16 %v253, %v252
      %v261 = vpack.c.b16 %v255, %v254
      %v262 = vpack.c.b16 %v257, %v256
      %v263 = vpack.c.b16 %v259, %v258
      %v270 = vunpack.c.l.b16 %v234
      %v271 = vunpack.c.l.b16 %v235
      %v272 = vunpack.c.l.b16 %v236
      %v273 = vunpack.c.l.b16 %v237
      %v274 = vunpack.c.l.b16 %v238
      %v275 = vunpack.c.l.b16 %v239
      %v276 = vpack.c.b16 %v271, %v270
      %v277 = vpack.c.b16 %v273, %v272
      %v278 = vpack.c.b16 %v275, %v274
      %vm282 = vcmask 392192
      %v284 = vsel %vm282, %v260, 0
      %v287 = vsel %vm282, %v261, 0
      %v290 = vsel %vm282, %v262, 0
      %v293 = vsel %vm282, %v263, 0
      %295 = vmatpush.bf16.msra.mxu0 0
      %296 = vmatpush.bf16.msra.mxu0 0
      %297 = vmatpush.bf16.msra.mxu0 0
      %298 = vmatpush.bf16.msra.mxu0 0
      %299 = vmatpush.bf16.msra.mxu0 0
      %300 = vmatpush.bf16.msra.mxu0 %v278
      %301 = vmatpush.bf16.msra.mxu0 %v277
      %302 = vmatpush.bf16.msra.mxu0 %v276
      %303 = vmatmul.bf16.gmra.mxu0 %v284
      %v304 = vpop.f32.mrf.mxu0
      %v305 = vadd.f32 %v242, %v304
      %v306 = vpop.f32.mrf.mxu0
      %v307 = vadd.f32 %v242, %v306
      %308 = vmatmul.bf16.gmra.mxu0 %v287
      %v309 = vpop.f32.mrf.mxu0
      %v310 = vadd.f32 %v242, %v309
      %v311 = vpop.f32.mrf.mxu0
      %v312 = vadd.f32 %v242, %v311
      %313 = vmatmul.bf16.gmra.mxu0 %v290
      %v314 = vpop.f32.mrf.mxu0
      %v315 = vadd.f32 %v242, %v314
      %v316 = vpop.f32.mrf.mxu0
      %v317 = vadd.f32 %v242, %v316
      %318 = vmatmul.bf16.gmra.mxu0 %v293
      %v319 = vpop.f32.mrf.mxu0
      %v320 = vadd.f32 %v242, %v319
      %v321 = vpop.f32.mrf.mxu0
      %v322 = vadd.f32 %v242, %v321
      %323 = vdwg.mxu0
      %v324 = vpack.c.bf16 %v305, %v305
      %v325 = vpack.c.bf16 %v307, %v307
      %v326 = vpack.c.bf16 %v310, %v310
      %v327 = vpack.c.bf16 %v312, %v312
      %v328 = vpack.c.bf16 %v315, %v315
      %v329 = vpack.c.bf16 %v317, %v317
      %v330 = vpack.c.bf16 %v320, %v320
      %v331 = vpack.c.bf16 %v322, %v322
      %332 = vst [vmem:[%s223] sm:$0xf] %v324
      %333 = vst [vmem:[%s223 + $0x4] sm:$0xf] %v325
      %334 = vst [vmem:[%s223 + $0x8] sm:$0xf] %v326
      %335 = vst [vmem:[%s223 + $0xc] sm:$0xf] %v327
      %336 = vst [vmem:[%s223 + $0x10] sm:$0xf] %v328
      %337 = vst [vmem:[%s223 + $0x14] sm:$0xf] %v329
      %338 = vst [vmem:[%s223 + $0x18] sm:$0xf] %v330
      %339 = vst [vmem:[%s223 + $0x1c] sm:$0xf] %v331
      %s340 = smul.u32 8, %s18
      %p341 = scmp.lt.s32.totalorder %s340, 15
      %s342 = scalar_select %p341, %s340, 15
      %p343 = scmp.lt.s32.totalorder %s19, 0
      %s344 = scalar_select %p343, %s19, 0
      %s345 = sadd.s32 %s344, %s342
      %s346 = smul.addr %s345, 4
      %s347 = scalar_lea.vmem %s3, %s346
      // Predicated region
      $region33: #{generator_forward.7} parent=31 // pred_check
        %p348 = pneg %p124
      $region34: #{generator_forward.7} parent=31 // pred_check_branch
        %350 = sbr.rel (%p348) target = $region36
      $region35: #{generator_forward.7} parent=31 // pred_region
        %s351 = smul.u32 8, %s18
      $region36: #{generator_forward.7} parent=31 // pred_fallthru
        _
    $region32: #{generator_forward.7} parent=5 // pred_fallthru
      _
    %p352 = scmp.le.s32.totalorder 2, %s9
    // Predicated region
    $region37: #{generator_forward.7} parent=5 // pred_check
      %p353 = pneg %p352
    $region38: #{generator_forward.7} parent=5 // pred_check_branch
      %355 = sbr.rel (%p353) target = $region40
    $region39: #{generator_forward.7} parent=5 // pred_region
      %s356 = ssub.s32 %s9, 2
      // Predicated region
      $region41: #{generator_forward.7} parent=39 // pred_check
        %p357 = pneg %p130
      $region42: #{generator_forward.7} parent=39 // pred_check_branch
        %359 = sbr.rel (%p357) target = $region44
      $region43: #{generator_forward.7} parent=39 // pred_region
        %s360 = smul.u32 8, %s20
        %p361 = scmp.lt.s32.totalorder %s360, 15
        %s362 = scalar_select %p361, %s360, 15
        %p363 = scmp.lt.s32.totalorder %s21, 0
        %s364 = scalar_select %p363, %s21, 0
        %s365 = sadd.s32 %s364, %s362
        %s366 = smul.addr %s365, 4
        %s367 = scalar_lea.vmem %s3, %s366
      $region44: #{generator_forward.7} parent=39 // pred_fallthru
        _
    $region40: #{generator_forward.7} parent=5 // pred_fallthru
      _
  $region6: #{generator_forward.7} parent=0 // loop_footer
    %s13 = sadd.s32 1, %s9
  $region7: #{generator_forward.7} parent=0 // loop_footer_branch
    %8 = sbr.rel target = $region3
  $region8: #{generator_forward.7} parent=0 // loop_exit
    _

// kernel: generator_forward.8
$region0: #{generator_forward.8}
  #allocation0 [shape = 'u32[]', space=smem, size = 0x4, offset = 0x4, fixed_abs, tag = 'smem constant byte address 0x4 - core index']
  #allocation1 [shape = 'u32[72,128]{1,0:T(1,128)}', space=vmem, size = 0x9000, scoped, tag = 'internal scratch']
  %s0 = inlined_call_operand.vmem [shape: bf16[32,128], index: 0, kind: input, shape index: {}]
  %s1 = inlined_call_operand.vmem [shape: bf16[128,128], index: 1, kind: input, shape index: {}]
  %s2 = inlined_call_operand.vmem [shape: f32[1,128], index: 2, kind: input, shape index: {}]
  %s3 = inlined_call_operand.vmem [shape: bf16[32,128], index: 3, kind: output, shape index: {}]
  %s4 = sld [smem:[#allocation0]]
  $region22: #{generator_forward.8} parent=0
    _
  %s6 = ssub.s32 1, %s4
  %s7 = scalar_select 0, %s6, %s4
  // Predicated region
  $region2: #{generator_forward.8} parent=0 // pred_check
    _
  $region3: #{generator_forward.8} parent=0 // pred_check_branch
    %9 = sbr.rel (0) target = $region5
  $region4: #{generator_forward.8} parent=0 // pred_region
    _
  $region5: #{generator_forward.8} parent=0 // pred_fallthru
    _
  // Predicated region
  $region6: #{generator_forward.8} parent=0 // pred_check
    _
  $region7: #{generator_forward.8} parent=0 // pred_check_branch
    %11 = sbr.rel (0) target = $region9
  $region8: #{generator_forward.8} parent=0 // pred_region
    _
  $region9: #{generator_forward.8} parent=0 // pred_fallthru
    _
  // Predicated region
  $region10: #{generator_forward.8} parent=0 // pred_check
    _
  $region11: #{generator_forward.8} parent=0 // pred_check_branch
    %13 = sbr.rel (0) target = $region13
  $region12: #{generator_forward.8} parent=0 // pred_region
    _
  $region13: #{generator_forward.8} parent=0 // pred_fallthru
    _
  %v14 = vld [vmem:[%s0] sm:$0xf]
  %v15 = vld [vmem:[%s0 + $0x4] sm:$0xf]
  %v16 = vld [vmem:[%s0 + $0x8] sm:$0xf]
  %v17 = vld [vmem:[%s0 + $0xc] sm:$0xf]
  %v18 = vld [vmem:[%s1] sm:$0xf]
  %v19 = vld [vmem:[%s1 + $0x4] sm:$0xf]
  %v20 = vld [vmem:[%s1 + $0x8] sm:$0xf]
  %v21 = vld [vmem:[%s1 + $0xc] sm:$0xf]
  %v22 = vld [vmem:[%s1 + $0x10] sm:$0xf]
  %v23 = vld [vmem:[%s1 + $0x14] sm:$0xf]
  %v24 = vld [vmem:[%s1 + $0x18] sm:$0xf]
  %v25 = vld [vmem:[%s1 + $0x1c] sm:$0xf]
  %v26 = vld [vmem:[%s1 + $0x20] sm:$0xf]
  %v27 = vld [vmem:[%s1 + $0x24] sm:$0xf]
  %v28 = vld [vmem:[%s1 + $0x28] sm:$0xf]
  %v29 = vld [vmem:[%s1 + $0x2c] sm:$0xf]
  %v30 = vld [vmem:[%s1 + $0x30] sm:$0xf]
  %v31 = vld [vmem:[%s1 + $0x34] sm:$0xf]
  %v32 = vld [vmem:[%s1 + $0x38] sm:$0xf]
  %v33 = vld [vmem:[%s1 + $0x3c] sm:$0xf]
  %v34 = vld [vmem:[%s2] sm:$0x1]
  %v36 = vperm.slane %v34, 0
  %v42 = vunpack.c.l.b16 %v14
  %v43 = vunpack.c.l.b16 %v15
  %v44 = vunpack.c.l.b16 %v16
  %v45 = vunpack.c.l.b16 %v17
  %v46 = vpack.c.b16 %v43, %v42
  %v47 = vpack.c.b16 %v45, %v44
  %v66 = vunpack.c.l.b16 %v18
  %v67 = vunpack.c.l.b16 %v19
  %v68 = vunpack.c.l.b16 %v20
  %v69 = vunpack.c.l.b16 %v21
  %v70 = vunpack.c.l.b16 %v22
  %v71 = vunpack.c.l.b16 %v23
  %v72 = vunpack.c.l.b16 %v24
  %v73 = vunpack.c.l.b16 %v25
  %v74 = vunpack.c.l.b16 %v26
  %v75 = vunpack.c.l.b16 %v27
  %v76 = vunpack.c.l.b16 %v28
  %v77 = vunpack.c.l.b16 %v29
  %v78 = vunpack.c.l.b16 %v30
  %v79 = vunpack.c.l.b16 %v31
  %v80 = vunpack.c.l.b16 %v32
  %v81 = vunpack.c.l.b16 %v33
  %v82 = vpack.c.b16 %v67, %v66
  %v83 = vpack.c.b16 %v69, %v68
  %v84 = vpack.c.b16 %v71, %v70
  %v85 = vpack.c.b16 %v73, %v72
  %v86 = vpack.c.b16 %v75, %v74
  %v87 = vpack.c.b16 %v77, %v76
  %v88 = vpack.c.b16 %v79, %v78
  %v89 = vpack.c.b16 %v81, %v80
  %98 = vmatpush.bf16.msra.mxu0 %v89
  %99 = vmatpush.bf16.msra.mxu0 %v88
  %100 = vmatpush.bf16.msra.mxu0 %v87
  %101 = vmatpush.bf16.msra.mxu0 %v86
  %102 = vmatpush.bf16.msra.mxu0 %v85
  %103 = vmatpush.bf16.msra.mxu0 %v84
  %104 = vmatpush.bf16.msra.mxu0 %v83
  %105 = vmatpush.bf16.msra.mxu0 %v82
  %106 = vmatmul.bf16.gmra.mxu0 %v46
  %v107 = vpop.f32.mrf.mxu0
  %v108 = vadd.f32 %v36, %v107
  %v109 = vpop.f32.mrf.mxu0
  %v110 = vadd.f32 %v36, %v109
  %111 = vmatmul.bf16.gmra.mxu0 %v47
  %v112 = vpop.f32.mrf.mxu0
  %v113 = vadd.f32 %v36, %v112
  %v114 = vpop.f32.mrf.mxu0
  %v115 = vadd.f32 %v36, %v114
  %116 = vdwg.mxu0
  %v117 = vpack.c.bf16 %v108, %v108
  %v118 = vpack.c.bf16 %v110, %v110
  %v119 = vpack.c.bf16 %v113, %v113
  %v120 = vpack.c.bf16 %v115, %v115
  %121 = vst [vmem:[%s3] sm:$0xf] %v117
  %122 = vst [vmem:[%s3 + $0x4] sm:$0xf] %v118
  %123 = vst [vmem:[%s3 + $0x8] sm:$0xf] %v119
  %124 = vst [vmem:[%s3 + $0xc] sm:$0xf] %v120
  // Predicated region
  $region14: #{generator_forward.8} parent=0 // pred_check
    _
  $region15: #{generator_forward.8} parent=0 // pred_check_branch
    %126 = sbr.rel (0) target = $region17
  $region16: #{generator_forward.8} parent=0 // pred_region
    _
  $region17: #{generator_forward.8} parent=0 // pred_fallthru
    _
  // Predicated region
  $region18: #{generator_forward.8} parent=0 // pred_check
    _
  $region19: #{generator_forward.8} parent=0 // pred_check_branch
    %128 = sbr.rel (0) target = $region21
  $region20: #{generator_forward.8} parent=0 // pred_region
    _
  $region21: #{generator_forward.8} parent=0 // pred_fallthru
    _

// kernel: generator_forward.9
$region0: #{generator_forward.9}
  #allocation0 [shape = 'u32[]', space=smem, size = 0x4, offset = 0x4, fixed_abs, tag = 'smem constant byte address 0x4 - core index']
  #allocation1 [shape = 'u32[72,128]{1,0:T(1,128)}', space=vmem, size = 0x9000, scoped, tag = 'internal scratch']
  %s0 = inlined_call_operand.vmem [shape: bf16[16,256], index: 0, kind: input, shape index: {}]
  %s1 = inlined_call_operand.vmem [shape: bf16[256,128], index: 1, kind: input, shape index: {}]
  %s2 = inlined_call_operand.vmem [shape: f32[1,128], index: 2, kind: input, shape index: {}]
  %s3 = inlined_call_operand.vmem [shape: bf16[16,128], index: 3, kind: output, shape index: {}]
  %s4 = sld [smem:[#allocation0]]
  $region22: #{generator_forward.9} parent=0
    _
  %s6 = ssub.s32 1, %s4
  %s7 = scalar_select 0, %s6, %s4
  // Predicated region
  $region2: #{generator_forward.9} parent=0 // pred_check
    _
  $region3: #{generator_forward.9} parent=0 // pred_check_branch
    %9 = sbr.rel (0) target = $region5
  $region4: #{generator_forward.9} parent=0 // pred_region
    _
  $region5: #{generator_forward.9} parent=0 // pred_fallthru
    _
  // Predicated region
  $region6: #{generator_forward.9} parent=0 // pred_check
    _
  $region7: #{generator_forward.9} parent=0 // pred_check_branch
    %11 = sbr.rel (0) target = $region9
  $region8: #{generator_forward.9} parent=0 // pred_region
    _
  $region9: #{generator_forward.9} parent=0 // pred_fallthru
    _
  // Predicated region
  $region10: #{generator_forward.9} parent=0 // pred_check
    _
  $region11: #{generator_forward.9} parent=0 // pred_check_branch
    %13 = sbr.rel (0) target = $region13
  $region12: #{generator_forward.9} parent=0 // pred_region
    _
  $region13: #{generator_forward.9} parent=0 // pred_fallthru
    _
  %v14 = vld [vmem:[%s0] sm:$0xff]
  %v15 = vld [vmem:[%s0 + $0x8] sm:$0xff]
  %v16 = vld [vmem:[%s1] sm:$0xf]
  %v17 = vld [vmem:[%s1 + $0x4] sm:$0xf]
  %v18 = vld [vmem:[%s1 + $0x8] sm:$0xf]
  %v19 = vld [vmem:[%s1 + $0xc] sm:$0xf]
  %v20 = vld [vmem:[%s1 + $0x10] sm:$0xf]
  %v21 = vld [vmem:[%s1 + $0x14] sm:$0xf]
  %v22 = vld [vmem:[%s1 + $0x18] sm:$0xf]
  %v23 = vld [vmem:[%s1 + $0x1c] sm:$0xf]
  %v24 = vld [vmem:[%s1 + $0x20] sm:$0xf]
  %v25 = vld [vmem:[%s1 + $0x24] sm:$0xf]
  %v26 = vld [vmem:[%s1 + $0x28] sm:$0xf]
  %v27 = vld [vmem:[%s1 + $0x2c] sm:$0xf]
  %v28 = vld [vmem:[%s1 + $0x30] sm:$0xf]
  %v29 = vld [vmem:[%s1 + $0x34] sm:$0xf]
  %v30 = vld [vmem:[%s1 + $0x38] sm:$0xf]
  %v31 = vld [vmem:[%s1 + $0x3c] sm:$0xf]
  %v32 = vld [vmem:[%s1 + $0x40] sm:$0xf]
  %v33 = vld [vmem:[%s1 + $0x44] sm:$0xf]
  %v34 = vld [vmem:[%s1 + $0x48] sm:$0xf]
  %v35 = vld [vmem:[%s1 + $0x4c] sm:$0xf]
  %v36 = vld [vmem:[%s1 + $0x50] sm:$0xf]
  %v37 = vld [vmem:[%s1 + $0x54] sm:$0xf]
  %v38 = vld [vmem:[%s1 + $0x58] sm:$0xf]
  %v39 = vld [vmem:[%s1 + $0x5c] sm:$0xf]
  %v40 = vld [vmem:[%s1 + $0x60] sm:$0xf]
  %v41 = vld [vmem:[%s1 + $0x64] sm:$0xf]
  %v42 = vld [vmem:[%s1 + $0x68] sm:$0xf]
  %v43 = vld [vmem:[%s1 + $0x6c] sm:$0xf]
  %v44 = vld [vmem:[%s1 + $0x70] sm:$0xf]
  %v45 = vld [vmem:[%s1 + $0x74] sm:$0xf]
  %v46 = vld [vmem:[%s1 + $0x78] sm:$0xf]
  %v47 = vld [vmem:[%s1 + $0x7c] sm:$0xf]
  %v48 = vld [vmem:[%s2] sm:$0x1]
  %v50 = vperm.slane %v48, 0
  %v54 = vunpack.c.l.b16 %v14
  %v55 = vunpack.c.h.b16 %v14
  %v56 = vunpack.c.l.b16 %v15
  %v57 = vunpack.c.h.b16 %v15
  %v58 = vpack.c.b16 %v56, %v54
  %v59 = vpack.c.b16 %v57, %v55
  %v94 = vunpack.c.l.b16 %v16
  %v95 = vunpack.c.l.b16 %v17
  %v96 = vunpack.c.l.b16 %v18
  %v97 = vunpack.c.l.b16 %v19
  %v98 = vunpack.c.l.b16 %v20
  %v99 = vunpack.c.l.b16 %v21
  %v100 = vunpack.c.l.b16 %v22
  %v101 = vunpack.c.l.b16 %v23
  %v102 = vunpack.c.l.b16 %v24
  %v103 = vunpack.c.l.b16 %v25
  %v104 = vunpack.c.l.b16 %v26
  %v105 = vunpack.c.l.b16 %v27
  %v106 = vunpack.c.l.b16 %v28
  %v107 = vunpack.c.l.b16 %v29
  %v108 = vunpack.c.l.b16 %v30
  %v109 = vunpack.c.l.b16 %v31
  %v110 = vunpack.c.l.b16 %v32
  %v111 = vunpack.c.l.b16 %v33
  %v112 = vunpack.c.l.b16 %v34
  %v113 = vunpack.c.l.b16 %v35
  %v114 = vunpack.c.l.b16 %v36
  %v115 = vunpack.c.l.b16 %v37
  %v116 = vunpack.c.l.b16 %v38
  %v117 = vunpack.c.l.b16 %v39
  %v118 = vunpack.c.l.b16 %v40
  %v119 = vunpack.c.l.b16 %v41
  %v120 = vunpack.c.l.b16 %v42
  %v121 = vunpack.c.l.b16 %v43
  %v122 = vunpack.c.l.b16 %v44
  %v123 = vunpack.c.l.b16 %v45
  %v124 = vunpack.c.l.b16 %v46
  %v125 = vunpack.c.l.b16 %v47
  %v126 = vpack.c.b16 %v95, %v94
  %v127 = vpack.c.b16 %v97, %v96
  %v128 = vpack.c.b16 %v99, %v98
  %v129 = vpack.c.b16 %v101, %v100
  %v130 = vpack.c.b16 %v103, %v102
  %v131 = vpack.c.b16 %v105, %v104
  %v132 = vpack.c.b16 %v107, %v106
  %v133 = vpack.c.b16 %v109, %v108
  %v134 = vpack.c.b16 %v111, %v110
  %v135 = vpack.c.b16 %v113, %v112
  %v136 = vpack.c.b16 %v115, %v114
  %v137 = vpack.c.b16 %v117, %v116
  %v138 = vpack.c.b16 %v119, %v118
  %v139 = vpack.c.b16 %v121, %v120
  %v140 = vpack.c.b16 %v123, %v122
  %v141 = vpack.c.b16 %v125, %v124
  %158 = vmatpush.bf16.msra.mxu0 %v133
  %159 = vmatpush.bf16.msra.mxu0 %v132
  %160 = vmatpush.bf16.msra.mxu0 %v131
  %161 = vmatpush.bf16.msra.mxu0 %v130
  %162 = vmatpush.bf16.msra.mxu0 %v129
  %163 = vmatpush.bf16.msra.mxu0 %v128
  %164 = vmatpush.bf16.msra.mxu0 %v127
  %165 = vmatpush.bf16.msra.mxu0 %v126
  %166 = vmatmul.bf16.gmra.mxu0 %v58
  %v167 = vpop.f32.mrf.mxu0
  %v168 = vadd.f32 %v50, %v167
  %v169 = vpop.f32.mrf.mxu0
  %v170 = vadd.f32 %v50, %v169
  %171 = vdwg.mxu0
  %172 = vmatpush.bf16.msra.mxu0 %v141
  %173 = vmatpush.bf16.msra.mxu0 %v140
  %174 = vmatpush.bf16.msra.mxu0 %v139
  %175 = vmatpush.bf16.msra.mxu0 %v138
  %176 = vmatpush.bf16.msra.mxu0 %v137
  %177 = vmatpush.bf16.msra.mxu0 %v136
  %178 = vmatpush.bf16.msra.mxu0 %v135
  %179 = vmatpush.bf16.msra.mxu0 %v134
  %180 = vmatmul.bf16.gmra.mxu0 %v59
  %v181 = vpop.f32.mrf.mxu0
  %v182 = vadd.f32 %v168, %v181
  %v183 = vpop.f32.mrf.mxu0
  %v184 = vadd.f32 %v170, %v183
  %185 = vdwg.mxu0
  %v186 = vpack.c.bf16 %v182, %v182
  %v187 = vpack.c.bf16 %v184, %v184
  %188 = vst [vmem:[%s3] sm:$0xf] %v186
  %189 = vst [vmem:[%s3 + $0x4] sm:$0xf] %v187
  // Predicated region
  $region14: #{generator_forward.9} parent=0 // pred_check
    _
  $region15: #{generator_forward.9} parent=0 // pred_check_branch
    %191 = sbr.rel (0) target = $region17
  $region16: #{generator_forward.9} parent=0 // pred_region
    _
  $region17: #{generator_forward.9} parent=0 // pred_fallthru
    _
  // Predicated region
  $region18: #{generator_forward.9} parent=0 // pred_check
    _
  $region19: #{generator_forward.9} parent=0 // pred_check_branch
    %193 = sbr.rel (0) target = $region21
  $region20: #{generator_forward.9} parent=0 // pred_region
    _
  $region21: #{generator_forward.9} parent=0 // pred_fallthru
    _

// kernel: generator_forward.10
$region0: #{generator_forward.10}
  #allocation0 [shape = 'u32[]', space=smem, size = 0x4, offset = 0x4, fixed_abs, tag = 'smem constant byte address 0x4 - core index']
  #allocation1 [shape = 'u32[72,128]{1,0:T(1,128)}', space=vmem, size = 0x9000, scoped, tag = 'internal scratch']
  %s0 = inlined_call_operand.vmem [shape: bf16[16,288], index: 0, kind: input, shape index: {}]
  %s1 = inlined_call_operand.vmem [shape: bf16[288,128], index: 1, kind: input, shape index: {}]
  %s2 = inlined_call_operand.vmem [shape: f32[1,128], index: 2, kind: input, shape index: {}]
  %s3 = inlined_call_operand.vmem [shape: bf16[16,128], index: 3, kind: output, shape index: {}]
  %s4 = sld [smem:[#allocation0]]
  $region22: #{generator_forward.10} parent=0
    _
  %s6 = ssub.s32 1, %s4
  %s7 = scalar_select 0, %s6, %s4
  // Predicated region
  $region2: #{generator_forward.10} parent=0 // pred_check
    _
  $region3: #{generator_forward.10} parent=0 // pred_check_branch
    %9 = sbr.rel (0) target = $region5
  $region4: #{generator_forward.10} parent=0 // pred_region
    _
  $region5: #{generator_forward.10} parent=0 // pred_fallthru
    _
  // Predicated region
  $region6: #{generator_forward.10} parent=0 // pred_check
    _
  $region7: #{generator_forward.10} parent=0 // pred_check_branch
    %11 = sbr.rel (0) target = $region9
  $region8: #{generator_forward.10} parent=0 // pred_region
    _
  $region9: #{generator_forward.10} parent=0 // pred_fallthru
    _
  // Predicated region
  $region10: #{generator_forward.10} parent=0 // pred_check
    _
  $region11: #{generator_forward.10} parent=0 // pred_check_branch
    %13 = sbr.rel (0) target = $region13
  $region12: #{generator_forward.10} parent=0 // pred_region
    _
  $region13: #{generator_forward.10} parent=0 // pred_fallthru
    _
  %v15 = vld [vmem:[%s0] sm:$0xff]
  %v16 = vld [vmem:[%s0 + $0x8] sm:$0xf]
  %v17 = vld [vmem:[%s0 + $0xc] sm:$0xff]
  %v18 = vld [vmem:[%s0 + $0x14] sm:$0xf]
  %v19 = vld [vmem:[%s1] sm:$0xf]
  %v20 = vld [vmem:[%s1 + $0x4] sm:$0xf]
  %v21 = vld [vmem:[%s1 + $0x8] sm:$0xf]
  %v22 = vld [vmem:[%s1 + $0xc] sm:$0xf]
  %v23 = vld [vmem:[%s1 + $0x10] sm:$0xf]
  %v24 = vld [vmem:[%s1 + $0x14] sm:$0xf]
  %v25 = vld [vmem:[%s1 + $0x18] sm:$0xf]
  %v26 = vld [vmem:[%s1 + $0x1c] sm:$0xf]
  %v27 = vld [vmem:[%s1 + $0x20] sm:$0xf]
  %v28 = vld [vmem:[%s1 + $0x24] sm:$0xf]
  %v29 = vld [vmem:[%s1 + $0x28] sm:$0xf]
  %v30 = vld [vmem:[%s1 + $0x2c] sm:$0xf]
  %v31 = vld [vmem:[%s1 + $0x30] sm:$0xf]
  %v32 = vld [vmem:[%s1 + $0x34] sm:$0xf]
  %v33 = vld [vmem:[%s1 + $0x38] sm:$0xf]
  %v34 = vld [vmem:[%s1 + $0x3c] sm:$0xf]
  %v35 = vld [vmem:[%s1 + $0x40] sm:$0xf]
  %v36 = vld [vmem:[%s1 + $0x44] sm:$0xf]
  %v37 = vld [vmem:[%s1 + $0x48] sm:$0xf]
  %v38 = vld [vmem:[%s1 + $0x4c] sm:$0xf]
  %v39 = vld [vmem:[%s1 + $0x50] sm:$0xf]
  %v40 = vld [vmem:[%s1 + $0x54] sm:$0xf]
  %v41 = vld [vmem:[%s1 + $0x58] sm:$0xf]
  %v42 = vld [vmem:[%s1 + $0x5c] sm:$0xf]
  %v43 = vld [vmem:[%s1 + $0x60] sm:$0xf]
  %v44 = vld [vmem:[%s1 + $0x64] sm:$0xf]
  %v45 = vld [vmem:[%s1 + $0x68] sm:$0xf]
  %v46 = vld [vmem:[%s1 + $0x6c] sm:$0xf]
  %v47 = vld [vmem:[%s1 + $0x70] sm:$0xf]
  %v48 = vld [vmem:[%s1 + $0x74] sm:$0xf]
  %v49 = vld [vmem:[%s1 + $0x78] sm:$0xf]
  %v50 = vld [vmem:[%s1 + $0x7c] sm:$0xf]
  %v51 = vld [vmem:[%s1 + $0x80] sm:$0xf]
  %v52 = vld [vmem:[%s1 + $0x84] sm:$0xf]
  %v53 = vld [vmem:[%s1 + $0x88] sm:$0xf]
  %v54 = vld [vmem:[%s1 + $0x8c] sm:$0xf]
  %v55 = vld [vmem:[%s2] sm:$0x1]
  %v57 = vperm.slane %v55, 0
  %v63 = vunpack.c.l.b16 %v15
  %v64 = vunpack.c.h.b16 %v15
  %v65 = vunpack.c.l.b16 %v16
  %v66 = vunpack.c.l.b16 %v17
  %v67 = vunpack.c.h.b16 %v17
  %v68 = vunpack.c.l.b16 %v18
  %v69 = vpack.c.b16 %v66, %v63
  %v70 = vpack.c.b16 %v67, %v64
  %v71 = vpack.c.b16 %v68, %v65
  %v110 = vunpack.c.l.b16 %v19
  %v111 = vunpack.c.l.b16 %v20
  %v112 = vunpack.c.l.b16 %v21
  %v113 = vunpack.c.l.b16 %v22
  %v114 = vunpack.c.l.b16 %v23
  %v115 = vunpack.c.l.b16 %v24
  %v116 = vunpack.c.l.b16 %v25
  %v117 = vunpack.c.l.b16 %v26
  %v118 = vunpack.c.l.b16 %v27
  %v119 = vunpack.c.l.b16 %v28
  %v120 = vunpack.c.l.b16 %v29
  %v121 = vunpack.c.l.b16 %v30
  %v122 = vunpack.c.l.b16 %v31
  %v123 = vunpack.c.l.b16 %v32
  %v124 = vunpack.c.l.b16 %v33
  %v125 = vunpack.c.l.b16 %v34
  %v126 = vunpack.c.l.b16 %v35
  %v127 = vunpack.c.l.b16 %v36
  %v128 = vunpack.c.l.b16 %v37
  %v129 = vunpack.c.l.b16 %v38
  %v130 = vunpack.c.l.b16 %v39
  %v131 = vunpack.c.l.b16 %v40
  %v132 = vunpack.c.l.b16 %v41
  %v133 = vunpack.c.l.b16 %v42
  %v134 = vunpack.c.l.b16 %v43
  %v135 = vunpack.c.l.b16 %v44
  %v136 = vunpack.c.l.b16 %v45
  %v137 = vunpack.c.l.b16 %v46
  %v138 = vunpack.c.l.b16 %v47
  %v139 = vunpack.c.l.b16 %v48
  %v140 = vunpack.c.l.b16 %v49
  %v141 = vunpack.c.l.b16 %v50
  %v142 = vunpack.c.l.b16 %v51
  %v143 = vunpack.c.l.b16 %v52
  %v144 = vunpack.c.l.b16 %v53
  %v145 = vunpack.c.l.b16 %v54
  %v146 = vpack.c.b16 %v111, %v110
  %v147 = vpack.c.b16 %v113, %v112
  %v148 = vpack.c.b16 %v115, %v114
  %v149 = vpack.c.b16 %v117, %v116
  %v150 = vpack.c.b16 %v119, %v118
  %v151 = vpack.c.b16 %v121, %v120
  %v152 = vpack.c.b16 %v123, %v122
  %v153 = vpack.c.b16 %v125, %v124
  %v154 = vpack.c.b16 %v127, %v126
  %v155 = vpack.c.b16 %v129, %v128
  %v156 = vpack.c.b16 %v131, %v130
  %v157 = vpack.c.b16 %v133, %v132
  %v158 = vpack.c.b16 %v135, %v134
  %v159 = vpack.c.b16 %v137, %v136
  %v160 = vpack.c.b16 %v139, %v138
  %v161 = vpack.c.b16 %v141, %v140
  %v162 = vpack.c.b16 %v143, %v142
  %v163 = vpack.c.b16 %v145, %v144
  %vm182 = vcmask 261120
  %v184 = vsel %vm182, %v71, 0
  %186 = vmatpush.bf16.msra.mxu0 %v153
  %187 = vmatpush.bf16.msra.mxu0 %v152
  %188 = vmatpush.bf16.msra.mxu0 %v151
  %189 = vmatpush.bf16.msra.mxu0 %v150
  %190 = vmatpush.bf16.msra.mxu0 %v149
  %191 = vmatpush.bf16.msra.mxu0 %v148
  %192 = vmatpush.bf16.msra.mxu0 %v147
  %193 = vmatpush.bf16.msra.mxu0 %v146
  %194 = vmatmul.bf16.gmra.mxu0 %v69
  %v195 = vpop.f32.mrf.mxu0
  %v196 = vadd.f32 %v57, %v195
  %v197 = vpop.f32.mrf.mxu0
  %v198 = vadd.f32 %v57, %v197
  %199 = vdwg.mxu0
  %200 = vmatpush.bf16.msra.mxu0 %v161
  %201 = vmatpush.bf16.msra.mxu0 %v160
  %202 = vmatpush.bf16.msra.mxu0 %v159
  %203 = vmatpush.bf16.msra.mxu0 %v158
  %204 = vmatpush.bf16.msra.mxu0 %v157
  %205 = vmatpush.bf16.msra.mxu0 %v156
  %206 = vmatpush.bf16.msra.mxu0 %v155
  %207 = vmatpush.bf16.msra.mxu0 %v154
  %208 = vmatmul.bf16.gmra.mxu0 %v70
  %v209 = vpop.f32.mrf.mxu0
  %v210 = vadd.f32 %v196, %v209
  %v211 = vpop.f32.mrf.mxu0
  %v212 = vadd.f32 %v198, %v211
  %213 = vdwg.mxu0
  %214 = vmatpush.bf16.msra.mxu0 0
  %215 = vmatpush.bf16.msra.mxu0 0
  %216 = vmatpush.bf16.msra.mxu0 0
  %217 = vmatpush.bf16.msra.mxu0 0
  %218 = vmatpush.bf16.msra.mxu0 0
  %219 = vmatpush.bf16.msra.mxu0 0
  %220 = vmatpush.bf16.msra.mxu0 %v163
  %221 = vmatpush.bf16.msra.mxu0 %v162
  %222 = vmatmul.bf16.gmra.mxu0 %v184
  %v223 = vpop.f32.mrf.mxu0
  %v224 = vadd.f32 %v210, %v223
  %v225 = vpop.f32.mrf.mxu0
  %v226 = vadd.f32 %v212, %v225
  %227 = vdwg.mxu0
  %v228 = vpack.c.bf16 %v224, %v224
  %v229 = vpack.c.bf16 %v226, %v226
  %230 = vst [vmem:[%s3] sm:$0xf] %v228
  %231 = vst [vmem:[%s3 + $0x4] sm:$0xf] %v229
  // Predicated region
  $region14: #{generator_forward.10} parent=0 // pred_check
    _
  $region15: #{generator_forward.10} parent=0 // pred_check_branch
    %233 = sbr.rel (0) target = $region17
  $region16: #{generator_forward.10} parent=0 // pred_region
    _
  $region17: #{generator_forward.10} parent=0 // pred_fallthru
    _
  // Predicated region
  $region18: #{generator_forward.10} parent=0 // pred_check
    _
  $region19: #{generator_forward.10} parent=0 // pred_check_branch
    %235 = sbr.rel (0) target = $region21
  $region20: #{generator_forward.10} parent=0 // pred_region
    _
  $region21: #{generator_forward.10} parent=0 // pred_fallthru
    _

// kernel: generator_forward.11
$region0: #{generator_forward.11}
  #allocation0 [shape = 'u32[]', space=smem, size = 0x4, offset = 0x4, fixed_abs, tag = 'smem constant byte address 0x4 - core index']
  #allocation1 [shape = 'u32[72,128]{1,0:T(1,128)}', space=vmem, size = 0x9000, scoped, tag = 'internal scratch']
  %s0 = inlined_call_operand.vmem [shape: bf16[32,288], index: 0, kind: input, shape index: {}]
  %s1 = inlined_call_operand.vmem [shape: bf16[288,128], index: 1, kind: input, shape index: {}]
  %s2 = inlined_call_operand.vmem [shape: f32[1,128], index: 2, kind: input, shape index: {}]
  %s3 = inlined_call_operand.vmem [shape: bf16[32,128], index: 3, kind: output, shape index: {}]
  %s4 = sld [smem:[#allocation0]]
  $region22: #{generator_forward.11} parent=0
    _
  %s6 = ssub.s32 1, %s4
  %s7 = scalar_select 0, %s6, %s4
  // Predicated region
  $region2: #{generator_forward.11} parent=0 // pred_check
    _
  $region3: #{generator_forward.11} parent=0 // pred_check_branch
    %9 = sbr.rel (0) target = $region5
  $region4: #{generator_forward.11} parent=0 // pred_region
    _
  $region5: #{generator_forward.11} parent=0 // pred_fallthru
    _
  // Predicated region
  $region6: #{generator_forward.11} parent=0 // pred_check
    _
  $region7: #{generator_forward.11} parent=0 // pred_check_branch
    %11 = sbr.rel (0) target = $region9
  $region8: #{generator_forward.11} parent=0 // pred_region
    _
  $region9: #{generator_forward.11} parent=0 // pred_fallthru
    _
  // Predicated region
  $region10: #{generator_forward.11} parent=0 // pred_check
    _
  $region11: #{generator_forward.11} parent=0 // pred_check_branch
    %13 = sbr.rel (0) target = $region13
  $region12: #{generator_forward.11} parent=0 // pred_region
    _
  $region13: #{generator_forward.11} parent=0 // pred_fallthru
    _
  %v15 = vld [vmem:[%s0] sm:$0xff]
  %v16 = vld [vmem:[%s0 + $0x8] sm:$0xf]
  %v17 = vld [vmem:[%s0 + $0xc] sm:$0xff]
  %v18 = vld [vmem:[%s0 + $0x14] sm:$0xf]
  %v19 = vld [vmem:[%s0 + $0x18] sm:$0xff]
  %v20 = vld [vmem:[%s0 + $0x20] sm:$0xf]
  %v21 = vld [vmem:[%s0 + $0x24] sm:$0xff]
  %v22 = vld [vmem:[%s0 + $0x2c] sm:$0xf]
  %v23 = vld [vmem:[%s1] sm:$0xf]
  %v24 = vld [vmem:[%s1 + $0x4] sm:$0xf]
  %v25 = vld [vmem:[%s1 + $0x8] sm:$0xf]
  %v26 = vld [vmem:[%s1 + $0xc] sm:$0xf]
  %v27 = vld [vmem:[%s1 + $0x10] sm:$0xf]
  %v28 = vld [vmem:[%s1 + $0x14] sm:$0xf]
  %v29 = vld [vmem:[%s1 + $0x18] sm:$0xf]
  %v30 = vld [vmem:[%s1 + $0x1c] sm:$0xf]
  %v31 = vld [vmem:[%s1 + $0x20] sm:$0xf]
  %v32 = vld [vmem:[%s1 + $0x24] sm:$0xf]
  %v33 = vld [vmem:[%s1 + $0x28] sm:$0xf]
  %v34 = vld [vmem:[%s1 + $0x2c] sm:$0xf]
  %v35 = vld [vmem:[%s1 + $0x30] sm:$0xf]
  %v36 = vld [vmem:[%s1 + $0x34] sm:$0xf]
  %v37 = vld [vmem:[%s1 + $0x38] sm:$0xf]
  %v38 = vld [vmem:[%s1 + $0x3c] sm:$0xf]
  %v39 = vld [vmem:[%s1 + $0x40] sm:$0xf]
  %v40 = vld [vmem:[%s1 + $0x44] sm:$0xf]
  %v41 = vld [vmem:[%s1 + $0x48] sm:$0xf]
  %v42 = vld [vmem:[%s1 + $0x4c] sm:$0xf]
  %v43 = vld [vmem:[%s1 + $0x50] sm:$0xf]
  %v44 = vld [vmem:[%s1 + $0x54] sm:$0xf]
  %v45 = vld [vmem:[%s1 + $0x58] sm:$0xf]
  %v46 = vld [vmem:[%s1 + $0x5c] sm:$0xf]
  %v47 = vld [vmem:[%s1 + $0x60] sm:$0xf]
  %v48 = vld [vmem:[%s1 + $0x64] sm:$0xf]
  %v49 = vld [vmem:[%s1 + $0x68] sm:$0xf]
  %v50 = vld [vmem:[%s1 + $0x6c] sm:$0xf]
  %v51 = vld [vmem:[%s1 + $0x70] sm:$0xf]
  %v52 = vld [vmem:[%s1 + $0x74] sm:$0xf]
  %v53 = vld [vmem:[%s1 + $0x78] sm:$0xf]
  %v54 = vld [vmem:[%s1 + $0x7c] sm:$0xf]
  %v55 = vld [vmem:[%s1 + $0x80] sm:$0xf]
  %v56 = vld [vmem:[%s1 + $0x84] sm:$0xf]
  %v57 = vld [vmem:[%s1 + $0x88] sm:$0xf]
  %v58 = vld [vmem:[%s1 + $0x8c] sm:$0xf]
  %v59 = vld [vmem:[%s2] sm:$0x1]
  %v61 = vperm.slane %v59, 0
  %v71 = vunpack.c.l.b16 %v15
  %v72 = vunpack.c.h.b16 %v15
  %v73 = vunpack.c.l.b16 %v16
  %v74 = vunpack.c.l.b16 %v17
  %v75 = vunpack.c.h.b16 %v17
  %v76 = vunpack.c.l.b16 %v18
  %v77 = vunpack.c.l.b16 %v19
  %v78 = vunpack.c.h.b16 %v19
  %v79 = vunpack.c.l.b16 %v20
  %v80 = vunpack.c.l.b16 %v21
  %v81 = vunpack.c.h.b16 %v21
  %v82 = vunpack.c.l.b16 %v22
  %v83 = vpack.c.b16 %v74, %v71
  %v84 = vpack.c.b16 %v75, %v72
  %v85 = vpack.c.b16 %v76, %v73
  %v86 = vpack.c.b16 %v80, %v77
  %v87 = vpack.c.b16 %v81, %v78
  %v88 = vpack.c.b16 %v82, %v79
  %v129 = vunpack.c.l.b16 %v23
  %v130 = vunpack.c.l.b16 %v24
  %v131 = vunpack.c.l.b16 %v25
  %v132 = vunpack.c.l.b16 %v26
  %v133 = vunpack.c.l.b16 %v27
  %v134 = vunpack.c.l.b16 %v28
  %v135 = vunpack.c.l.b16 %v29
  %v136 = vunpack.c.l.b16 %v30
  %v137 = vunpack.c.l.b16 %v31
  %v138 = vunpack.c.l.b16 %v32
  %v139 = vunpack.c.l.b16 %v33
  %v140 = vunpack.c.l.b16 %v34
  %v141 = vunpack.c.l.b16 %v35
  %v142 = vunpack.c.l.b16 %v36
  %v143 = vunpack.c.l.b16 %v37
  %v144 = vunpack.c.l.b16 %v38
  %v145 = vunpack.c.l.b16 %v39
  %v146 = vunpack.c.l.b16 %v40
  %v147 = vunpack.c.l.b16 %v41
  %v148 = vunpack.c.l.b16 %v42
  %v149 = vunpack.c.l.b16 %v43
  %v150 = vunpack.c.l.b16 %v44
  %v151 = vunpack.c.l.b16 %v45
  %v152 = vunpack.c.l.b16 %v46
  %v153 = vunpack.c.l.b16 %v47
  %v154 = vunpack.c.l.b16 %v48
  %v155 = vunpack.c.l.b16 %v49
  %v156 = vunpack.c.l.b16 %v50
  %v157 = vunpack.c.l.b16 %v51
  %v158 = vunpack.c.l.b16 %v52
  %v159 = vunpack.c.l.b16 %v53
  %v160 = vunpack.c.l.b16 %v54
  %v161 = vunpack.c.l.b16 %v55
  %v162 = vunpack.c.l.b16 %v56
  %v163 = vunpack.c.l.b16 %v57
  %v164 = vunpack.c.l.b16 %v58
  %v165 = vpack.c.b16 %v130, %v129
  %v166 = vpack.c.b16 %v132, %v131
  %v167 = vpack.c.b16 %v134, %v133
  %v168 = vpack.c.b16 %v136, %v135
  %v169 = vpack.c.b16 %v138, %v137
  %v170 = vpack.c.b16 %v140, %v139
  %v171 = vpack.c.b16 %v142, %v141
  %v172 = vpack.c.b16 %v144, %v143
  %v173 = vpack.c.b16 %v146, %v145
  %v174 = vpack.c.b16 %v148, %v147
  %v175 = vpack.c.b16 %v150, %v149
  %v176 = vpack.c.b16 %v152, %v151
  %v177 = vpack.c.b16 %v154, %v153
  %v178 = vpack.c.b16 %v156, %v155
  %v179 = vpack.c.b16 %v158, %v157
  %v180 = vpack.c.b16 %v160, %v159
  %v181 = vpack.c.b16 %v162, %v161
  %v182 = vpack.c.b16 %v164, %v163
  %vm201 = vcmask 261120
  %v203 = vsel %vm201, %v85, 0
  %v206 = vsel %vm201, %v88, 0
  %208 = vmatpush.bf16.msra.mxu0 %v172
  %209 = vmatpush.bf16.msra.mxu0 %v171
  %210 = vmatpush.bf16.msra.mxu0 %v170
  %211 = vmatpush.bf16.msra.mxu0 %v169
  %212 = vmatpush.bf16.msra.mxu0 %v168
  %213 = vmatpush.bf16.msra.mxu0 %v167
  %214 = vmatpush.bf16.msra.mxu0 %v166
  %215 = vmatpush.bf16.msra.mxu0 %v165
  %216 = vmatmul.bf16.gmra.mxu0 %v83
  %v217 = vpop.f32.mrf.mxu0
  %v218 = vadd.f32 %v61, %v217
  %v219 = vpop.f32.mrf.mxu0
  %v220 = vadd.f32 %v61, %v219
  %221 = vmatmul.bf16.gmra.mxu0 %v86
  %v222 = vpop.f32.mrf.mxu0
  %v223 = vadd.f32 %v61, %v222
  %v224 = vpop.f32.mrf.mxu0
  %v225 = vadd.f32 %v61, %v224
  %226 = vdwg.mxu0
  %227 = vmatpush.bf16.msra.mxu0 %v180
  %228 = vmatpush.bf16.msra.mxu0 %v179
  %229 = vmatpush.bf16.msra.mxu0 %v178
  %230 = vmatpush.bf16.msra.mxu0 %v177
  %231 = vmatpush.bf16.msra.mxu0 %v176
  %232 = vmatpush.bf16.msra.mxu0 %v175
  %233 = vmatpush.bf16.msra.mxu0 %v174
  %234 = vmatpush.bf16.msra.mxu0 %v173
  %235 = vmatmul.bf16.gmra.mxu0 %v84
  %v236 = vpop.f32.mrf.mxu0
  %v237 = vadd.f32 %v218, %v236
  %v238 = vpop.f32.mrf.mxu0
  %v239 = vadd.f32 %v220, %v238
  %240 = vmatmul.bf16.gmra.mxu0 %v87
  %v241 = vpop.f32.mrf.mxu0
  %v242 = vadd.f32 %v223, %v241
  %v243 = vpop.f32.mrf.mxu0
  %v244 = vadd.f32 %v225, %v243
  %245 = vdwg.mxu0
  %246 = vmatpush.bf16.msra.mxu0 0
  %247 = vmatpush.bf16.msra.mxu0 0
  %248 = vmatpush.bf16.msra.mxu0 0
  %249 = vmatpush.bf16.msra.mxu0 0
  %250 = vmatpush.bf16.msra.mxu0 0
  %251 = vmatpush.bf16.msra.mxu0 0
  %252 = vmatpush.bf16.msra.mxu0 %v182
  %253 = vmatpush.bf16.msra.mxu0 %v181
  %254 = vmatmul.bf16.gmra.mxu0 %v203
  %v255 = vpop.f32.mrf.mxu0
  %v256 = vadd.f32 %v237, %v255
  %v257 = vpop.f32.mrf.mxu0
  %v258 = vadd.f32 %v239, %v257
  %259 = vmatmul.bf16.gmra.mxu0 %v206
  %v260 = vpop.f32.mrf.mxu0
  %v261 = vadd.f32 %v242, %v260
  %v262 = vpop.f32.mrf.mxu0
  %v263 = vadd.f32 %v244, %v262
  %264 = vdwg.mxu0
  %v265 = vpack.c.bf16 %v256, %v256
  %v266 = vpack.c.bf16 %v258, %v258
  %v267 = vpack.c.bf16 %v261, %v261
  %v268 = vpack.c.bf16 %v263, %v263
  %269 = vst [vmem:[%s3] sm:$0xf] %v265
  %270 = vst [vmem:[%s3 + $0x4] sm:$0xf] %v266
  %271 = vst [vmem:[%s3 + $0x8] sm:$0xf] %v267
  %272 = vst [vmem:[%s3 + $0xc] sm:$0xf] %v268
  // Predicated region
  $region14: #{generator_forward.11} parent=0 // pred_check
    _
  $region15: #{generator_forward.11} parent=0 // pred_check_branch
    %274 = sbr.rel (0) target = $region17
  $region16: #{generator_forward.11} parent=0 // pred_region
    _
  $region17: #{generator_forward.11} parent=0 // pred_fallthru
    _
  // Predicated region
  $region18: #{generator_forward.11} parent=0 // pred_check
    _
  $region19: #{generator_forward.11} parent=0 // pred_check_branch
    %276 = sbr.rel (0) target = $region21
  $region20: #{generator_forward.11} parent=0 // pred_region
    _
  $region21: #{generator_forward.11} parent=0 // pred_fallthru
    _

// kernel: generator_forward.12
$region0: #{generator_forward.12}
  #allocation0 [shape = 'u32[]', space=smem, size = 0x4, offset = 0x4, fixed_abs, tag = 'smem constant byte address 0x4 - core index']
  #allocation1 [shape = 'u32[72,128]{1,0:T(1,128)}', space=vmem, size = 0x9000, scoped, tag = 'internal scratch']
  %s0 = inlined_call_operand.vmem [shape: bf16[128,144], index: 0, kind: input, shape index: {}]
  %s1 = inlined_call_operand.vmem [shape: bf16[144,128], index: 1, kind: input, shape index: {}]
  %s2 = inlined_call_operand.vmem [shape: f32[1,128], index: 2, kind: input, shape index: {}]
  %s3 = inlined_call_operand.vmem [shape: bf16[128,128], index: 3, kind: output, shape index: {}]
  %s4 = sld [smem:[#allocation0]]
  $region45: #{generator_forward.12} parent=0
    _
  %s6 = ssub.s32 1, %s4
  %s7 = scalar_select 0, %s6, %s4
  loop: start=0, step=1, limit=4
  $region2: #{generator_forward.12} parent=0 // loop_pre_header
    _
  $region3: #{generator_forward.12} parent=0 // loop_header
    %s9 = sphi 0, %s13
    %p10 = scmp.ge.s32.totalorder %s9, 4
    %s16 = sphi 0, %s28
    %s17 = sphi 0, %s24
    %s18 = sphi 0, %s16
    %s19 = sphi 0, %s17
    %s20 = sphi 0, %s18
    %s21 = sphi 0, %s19
    %s31 = sphi 0, %s33
    %s34 = sphi 0, %s31
    %s35 = sphi 0, %s34
    %s51 = sphi 0, %s35
    %s57 = sphi 0, %s59
    %s60 = sphi 0, %s57
    %s61 = sphi 0, %s60
    %s77 = sphi 0, %s61
    %s83 = sphi 0, %s85
    %s86 = sphi 0, %s83
    %s87 = sphi 0, %s86
    %s103 = sphi 0, %s87
    %s111 = sphi 0, %s113
    %s114 = sphi 0, %s111
    %s115 = sphi 0, %s114
    %s131 = sphi 0, %s115
  $region4: #{generator_forward.12} parent=0 // loop_header_branch
    %12 = sbr.rel (%p10) target = $region8
  $region5: #{generator_forward.12} parent=0 // loop_body
    %s14 = ssub.s32 %s9, 1
    %s15 = ssub.s32 %s9, 2
    %s22 = sadd.s32 1, %s17
    %p23 = scmp.ge.s32.totalorder %s22, 1
    %s24 = scalar_select %p23, 0, %s22
    %s25 = sadd.s32 1, %s16
    %s26 = scalar_select %p23, %s25, %s16
    %p27 = scmp.ge.s32.totalorder %s26, 2
    %s28 = scalar_select %p27, 0, %s26
    %s29 = ssub.s32 %s16, %s28
    %p30 = scmp.eq.s32.totalorder %s29, 0
    %s32 = sadd.s32 %s31, 1
    %s33 = scalar_select %p30, %s31, %s32
    %p36 = pneg %p30
    %p37 = scmp.eq.s32.totalorder %s9, 1
    %p38 = por %p36, %p37
    %p39 = scmp.ne.s32.totalorder %s31, %s34
    %p40 = scmp.eq.s32.totalorder %s9, 0
    %p41 = por %p39, %p40
    %p42 = scmp.ne.s32.totalorder %s31, %s34
    %p43 = scmp.eq.s32.totalorder %s14, 1
    %p44 = por %p42, %p43
    %p45 = scmp.ne.s32.totalorder %s34, %s35
    %p46 = scmp.eq.s32.totalorder %s14, 0
    %p47 = por %p45, %p46
    %p48 = scmp.ne.s32.totalorder %s34, %s35
    %p49 = scmp.eq.s32.totalorder %s15, 1
    %p50 = por %p48, %p49
    %p52 = scmp.ne.s32.totalorder %s35, %s51
    %p53 = scmp.eq.s32.totalorder %s15, 0
    %p54 = por %p52, %p53
    %s55 = ssub.s32 %s17, %s24
    %p56 = scmp.eq.s32.totalorder %s55, 0
    %s58 = sadd.s32 %s57, 1
    %s59 = scalar_select %p56, %s57, %s58
    %p62 = pneg %p56
    %p63 = scmp.eq.s32.totalorder %s9, 1
    %p64 = por %p62, %p63
    %p65 = scmp.ne.s32.totalorder %s57, %s60
    %p66 = scmp.eq.s32.totalorder %s9, 0
    %p67 = por %p65, %p66
    %p68 = scmp.ne.s32.totalorder %s57, %s60
    %p69 = scmp.eq.s32.totalorder %s14, 1
    %p70 = por %p68, %p69
    %p71 = scmp.ne.s32.totalorder %s60, %s61
    %p72 = scmp.eq.s32.totalorder %s14, 0
    %p73 = por %p71, %p72
    %p74 = scmp.ne.s32.totalorder %s60, %s61
    %p75 = scmp.eq.s32.totalorder %s15, 1
    %p76 = por %p74, %p75
    %p78 = scmp.ne.s32.totalorder %s61, %s77
    %p79 = scmp.eq.s32.totalorder %s15, 0
    %p80 = por %p78, %p79
    %s81 = ssub.s32 %s17, %s24
    %p82 = scmp.eq.s32.totalorder %s81, 0
    %s84 = sadd.s32 %s83, 1
    %s85 = scalar_select %p82, %s83, %s84
    %p88 = pneg %p82
    %p89 = scmp.eq.s32.totalorder %s9, 1
    %p90 = por %p88, %p89
    %p91 = scmp.ne.s32.totalorder %s83, %s86
    %p92 = scmp.eq.s32.totalorder %s9, 0
    %p93 = por %p91, %p92
    %p94 = scmp.ne.s32.totalorder %s83, %s86
    %p95 = scmp.eq.s32.totalorder %s14, 1
    %p96 = por %p94, %p95
    %p97 = scmp.ne.s32.totalorder %s86, %s87
    %p98 = scmp.eq.s32.totalorder %s14, 0
    %p99 = por %p97, %p98
    %p100 = scmp.ne.s32.totalorder %s86, %s87
    %p101 = scmp.eq.s32.totalorder %s15, 1
    %p102 = por %p100, %p101
    %p104 = scmp.ne.s32.totalorder %s87, %s103
    %p105 = scmp.eq.s32.totalorder %s15, 0
    %p106 = por %p104, %p105
    %s107 = ssub.s32 %s16, %s28
    %s108 = ssub.s32 %s17, %s24
    %s109 = sor.u32 %s107, %s108
    %p110 = scmp.eq.s32.totalorder %s109, 0
    %s112 = sadd.s32 %s111, 1
    %s113 = scalar_select %p110, %s111, %s112
    %p116 = pneg %p110
    %p117 = scmp.eq.s32.totalorder %s9, 1
    %p118 = por %p116, %p117
    %p119 = scmp.ne.s32.totalorder %s111, %s114
    %p120 = scmp.eq.s32.totalorder %s9, 0
    %p121 = por %p119, %p120
    %p122 = scmp.ne.s32.totalorder %s111, %s114
    %p123 = scmp.eq.s32.totalorder %s14, 1
    %p124 = por %p122, %p123
    %p125 = scmp.ne.s32.totalorder %s114, %s115
    %p126 = scmp.eq.s32.totalorder %s14, 0
    %p127 = por %p125, %p126
    %p128 = scmp.ne.s32.totalorder %s114, %s115
    %p129 = scmp.eq.s32.totalorder %s15, 1
    %p130 = por %p128, %p129
    %p132 = scmp.ne.s32.totalorder %s115, %s131
    %p133 = scmp.eq.s32.totalorder %s15, 0
    %p134 = por %p132, %p133
    %p135 = scmp.le.s32.totalorder 1, %s9
    %p136 = scmp.lt.s32.totalorder %s9, 3
    %p137 = pnand %p135, %p136
    %p138 = pneg %p137
    // Predicated region
    $region9: #{generator_forward.12} parent=5 // pred_check
      _
    $region10: #{generator_forward.12} parent=5 // pred_check_branch
      %140 = sbr.rel (%p137) target = $region12
    $region11: #{generator_forward.12} parent=5 // pred_region
      %s141 = ssub.s32 %s9, 1
      // Predicated region
      $region13: #{generator_forward.12} parent=11 // pred_check
        %p142 = pneg %p73
      $region14: #{generator_forward.12} parent=11 // pred_check_branch
        %144 = sbr.rel (%p142) target = $region16
      $region15: #{generator_forward.12} parent=11 // pred_region
        %p145 = scmp.lt.s32.totalorder %s19, 0
        %s146 = scalar_select %p145, %s19, 0
        %s147 = smul.addr %s146, 4
        %s148 = scalar_lea.vmem %s1, %s147
      $region16: #{generator_forward.12} parent=11 // pred_fallthru
        _
      // Predicated region
      $region17: #{generator_forward.12} parent=11 // pred_check
        %p149 = pneg %p99
      $region18: #{generator_forward.12} parent=11 // pred_check_branch
        %151 = sbr.rel (%p149) target = $region20
      $region19: #{generator_forward.12} parent=11 // pred_region
        %p152 = scmp.lt.s32.totalorder %s19, 0
        %s153 = scalar_select %p152, %s19, 0
        %s154 = scalar_lea.vmem %s2, %s153
      $region20: #{generator_forward.12} parent=11 // pred_fallthru
        _
    $region12: #{generator_forward.12} parent=5 // pred_fallthru
      _
    %p155 = scmp.lt.s32.totalorder %s9, 2
    // Predicated region
    $region21: #{generator_forward.12} parent=5 // pred_check
      %p156 = pneg %p155
    $region22: #{generator_forward.12} parent=5 // pred_check_branch
      %158 = sbr.rel (%p156) target = $region24
    $region23: #{generator_forward.12} parent=5 // pred_region
      // Predicated region
      $region25: #{generator_forward.12} parent=23 // pred_check
        %p159 = pneg %p41
      $region26: #{generator_forward.12} parent=23 // pred_check_branch
        %161 = sbr.rel (%p159) target = $region28
      $region27: #{generator_forward.12} parent=23 // pred_region
        %s162 = smul.u32 8, %s16
        %p163 = scmp.lt.s32.totalorder %s162, 15
        %s164 = scalar_select %p163, %s162, 15
        %s165 = smul.addr %s164, 2
        %s166 = smul.addr %s165, 4
        %s167 = scalar_lea.vmem %s0, %s166
        %s168 = smul.u32 8, %s16
      $region28: #{generator_forward.12} parent=23 // pred_fallthru
        _
    $region24: #{generator_forward.12} parent=5 // pred_fallthru
      _
    %p169 = scmp.le.s32.totalorder 1, %s9
    %p170 = scmp.lt.s32.totalorder %s9, 3
    %p171 = pnand %p169, %p170
    %p172 = pneg %p171
    // Predicated region
    $region29: #{generator_forward.12} parent=5 // pred_check
      _
    $region30: #{generator_forward.12} parent=5 // pred_check_branch
      %174 = sbr.rel (%p171) target = $region32
    $region31: #{generator_forward.12} parent=5 // pred_region
      %s175 = ssub.s32 %s9, 1
      %s176 = smul.u32 8, %s18
      %p177 = scmp.lt.s32.totalorder %s176, 15
      %s178 = scalar_select %p177, %s176, 15
      %s179 = smul.addr %s178, 2
      %s180 = smul.addr %s179, 4
      %s181 = scalar_lea.vmem %s0, %s180
      %p182 = pneg %p47
      %p183 = pneg %p44
      %p184 = scmp.lt.s32.totalorder %s19, 0
      %s185 = scalar_select %p184, %s19, 0
      %s186 = smul.addr %s185, 4
      %s187 = scalar_lea.vmem %s1, %s186
      %p188 = pneg %p73
      %p189 = pneg %p70
      %p190 = scmp.lt.s32.totalorder %s19, 0
      %s191 = scalar_select %p190, %s19, 0
      %s192 = scalar_lea.vmem %s2, %s191
      %p193 = pneg %p99
      %p194 = pneg %p96
      %p195 = pneg %p127
      %p196 = pneg %p124
      %s197 = smul.u32 8, %s18
      %p198 = scmp.lt.s32.totalorder %s197, 15
      %s199 = scalar_select %p198, %s197, 15
      %p200 = scmp.lt.s32.totalorder %s19, 0
      %s201 = scalar_select %p200, %s19, 0
      %s202 = sadd.s32 %s201, %s199
      %s203 = smul.addr %s202, 4
      %s204 = scalar_lea.vmem %s3, %s203
      %s205 = smul.u32 8, %s18
      %p206 = scmp.lt.s32.totalorder %s205, 15
      %s207 = scalar_select %p206, %s205, 15
      %s208 = smul.addr %s207, 2
      %s209 = smul.addr %s208, 4
      %s210 = scalar_lea.vmem %s0, %s209
      %s211 = smul.u32 8, %s18
      %p212 = scmp.lt.s32.totalorder %s19, 0
      %s213 = scalar_select %p212, %s19, 0
      %s214 = smul.addr %s213, 4
      %s215 = scalar_lea.vmem %s1, %s214
      %p216 = scmp.lt.s32.totalorder %s19, 0
      %s217 = scalar_select %p216, %s19, 0
      %s218 = scalar_lea.vmem %s2, %s217
      %s219 = smul.u32 8, %s18
      %p220 = scmp.lt.s32.totalorder %s219, 15
      %s221 = scalar_select %p220, %s219, 15
      %p222 = scmp.lt.s32.totalorder %s19, 0
      %s223 = scalar_select %p222, %s19, 0
      %s224 = sadd.s32 %s223, %s221
      %s225 = smul.addr %s224, 4
      %s226 = scalar_lea.vmem %s3, %s225
      %s227 = smul.u32 8, %s18
      %v229 = vld [vmem:[%s210] sm:$0xff]
      %v230 = vld [vmem:[%s210 + $0x8] sm:$0xff]
      %v231 = vld [vmem:[%s210 + $0x10] sm:$0xff]
      %v232 = vld [vmem:[%s210 + $0x18] sm:$0xff]
      %v233 = vld [vmem:[%s210 + $0x20] sm:$0xff]
      %v234 = vld [vmem:[%s210 + $0x28] sm:$0xff]
      %v235 = vld [vmem:[%s210 + $0x30] sm:$0xff]
      %v236 = vld [vmem:[%s210 + $0x38] sm:$0xff]
      %v237 = vld [vmem:[%s215] sm:$0xf]
      %v238 = vld [vmem:[%s215 + $0x4] sm:$0xf]
      %v239 = vld [vmem:[%s215 + $0x8] sm:$0xf]
      %v240 = vld [vmem:[%s215 + $0xc] sm:$0xf]
      %v241 = vld [vmem:[%s215 + $0x10] sm:$0xf]
      %v242 = vld [vmem:[%s215 + $0x14] sm:$0xf]
      %v243 = vld [vmem:[%s215 + $0x18] sm:$0xf]
      %v244 = vld [vmem:[%s215 + $0x1c] sm:$0xf]
      %v245 = vld [vmem:[%s215 + $0x20] sm:$0xf]
      %v246 = vld [vmem:[%s215 + $0x24] sm:$0xf]
      %v247 = vld [vmem:[%s215 + $0x28] sm:$0xf]
      %v248 = vld [vmem:[%s215 + $0x2c] sm:$0xf]
      %v249 = vld [vmem:[%s215 + $0x30] sm:$0xf]
      %v250 = vld [vmem:[%s215 + $0x34] sm:$0xf]
      %v251 = vld [vmem:[%s215 + $0x38] sm:$0xf]
      %v252 = vld [vmem:[%s215 + $0x3c] sm:$0xf]
      %v253 = vld [vmem:[%s215 + $0x40] sm:$0xf]
      %v254 = vld [vmem:[%s215 + $0x44] sm:$0xf]
      %v255 = vld [vmem:[%s218] sm:$0x1]
      %v257 = vperm.slane %v255, 0
      %v267 = vunpack.c.l.b16 %v229
      %v268 = vunpack.c.h.b16 %v229
      %v269 = vunpack.c.l.b16 %v230
      %v270 = vunpack.c.h.b16 %v230
      %v271 = vunpack.c.l.b16 %v231
      %v272 = vunpack.c.h.b16 %v231
      %v273 = vunpack.c.l.b16 %v232
      %v274 = vunpack.c.h.b16 %v232
      %v275 = vunpack.c.l.b16 %v233
      %v276 = vunpack.c.h.b16 %v233
      %v277 = vunpack.c.l.b16 %v234
      %v278 = vunpack.c.h.b16 %v234
      %v279 = vunpack.c.l.b16 %v235
      %v280 = vunpack.c.h.b16 %v235
      %v281 = vunpack.c.l.b16 %v236
      %v282 = vunpack.c.h.b16 %v236
      %v283 = vpack.c.b16 %v269, %v267
      %v284 = vpack.c.b16 %v270, %v268
      %v285 = vpack.c.b16 %v273, %v271
      %v286 = vpack.c.b16 %v274, %v272
      %v287 = vpack.c.b16 %v277, %v275
      %v288 = vpack.c.b16 %v278, %v276
      %v289 = vpack.c.b16 %v281, %v279
      %v290 = vpack.c.b16 %v282, %v280
      %v313 = vunpack.c.l.b16 %v237
      %v314 = vunpack.c.l.b16 %v238
      %v315 = vunpack.c.l.b16 %v239
      %v316 = vunpack.c.l.b16 %v240
      %v317 = vunpack.c.l.b16 %v241
      %v318 = vunpack.c.l.b16 %v242
      %v319 = vunpack.c.l.b16 %v243
      %v320 = vunpack.c.l.b16 %v244
      %v321 = vunpack.c.l.b16 %v245
      %v322 = vunpack.c.l.b16 %v246
      %v323 = vunpack.c.l.b16 %v247
      %v324 = vunpack.c.l.b16 %v248
      %v325 = vunpack.c.l.b16 %v249
      %v326 = vunpack.c.l.b16 %v250
      %v327 = vunpack.c.l.b16 %v251
      %v328 = vunpack.c.l.b16 %v252
      %v329 = vunpack.c.l.b16 %v253
      %v330 = vunpack.c.l.b16 %v254
      %v331 = vpack.c.b16 %v314, %v313
      %v332 = vpack.c.b16 %v316, %v315
      %v333 = vpack.c.b16 %v318, %v317
      %v334 = vpack.c.b16 %v320, %v319
      %v335 = vpack.c.b16 %v322, %v321
      %v336 = vpack.c.b16 %v324, %v323
      %v337 = vpack.c.b16 %v326, %v325
      %v338 = vpack.c.b16 %v328, %v327
      %v339 = vpack.c.b16 %v330, %v329
      %vm349 = vcmask 130048
      %v351 = vsel %vm349, %v284, 0
      %v354 = vsel %vm349, %v286, 0
      %v357 = vsel %vm349, %v288, 0
      %v360 = vsel %vm349, %v290, 0
      %362 = vmatpush.bf16.msra.mxu0 %v338
      %363 = vmatpush.bf16.msra.mxu0 %v337
      %364 = vmatpush.bf16.msra.mxu0 %v336
      %365 = vmatpush.bf16.msra.mxu0 %v335
      %366 = vmatpush.bf16.msra.mxu0 %v334
      %367 = vmatpush.bf16.msra.mxu0 %v333
      %368 = vmatpush.bf16.msra.mxu0 %v332
      %369 = vmatpush.bf16.msra.mxu0 %v331
      %370 = vmatmul.bf16.gmra.mxu0 %v283
      %v371 = vpop.f32.mrf.mxu0
      %v372 = vadd.f32 %v257, %v371
      %v373 = vpop.f32.mrf.mxu0
      %v374 = vadd.f32 %v257, %v373
      %375 = vmatmul.bf16.gmra.mxu0 %v285
      %v376 = vpop.f32.mrf.mxu0
      %v377 = vadd.f32 %v257, %v376
      %v378 = vpop.f32.mrf.mxu0
      %v379 = vadd.f32 %v257, %v378
      %380 = vmatmul.bf16.gmra.mxu0 %v287
      %v381 = vpop.f32.mrf.mxu0
      %v382 = vadd.f32 %v257, %v381
      %v383 = vpop.f32.mrf.mxu0
      %v384 = vadd.f32 %v257, %v383
      %385 = vmatmul.bf16.gmra.mxu0 %v289
      %v386 = vpop.f32.mrf.mxu0
      %v387 = vadd.f32 %v257, %v386
      %v388 = vpop.f32.mrf.mxu0
      %v389 = vadd.f32 %v257, %v388
      %390 = vdwg.mxu0
      %391 = vmatpush.bf16.msra.mxu0 0
      %392 = vmatpush.bf16.msra.mxu0 0
      %393 = vmatpush.bf16.msra.mxu0 0
      %394 = vmatpush.bf16.msra.mxu0 0
      %395 = vmatpush.bf16.msra.mxu0 0
      %396 = vmatpush.bf16.msra.mxu0 0
      %397 = vmatpush.bf16.msra.mxu0 0
      %398 = vmatpush.bf16.msra.mxu0 %v339
      %399 = vmatmul.bf16.gmra.mxu0 %v351
      %v400 = vpop.f32.mrf.mxu0
      %v401 = vadd.f32 %v372, %v400
      %v402 = vpop.f32.mrf.mxu0
      %v403 = vadd.f32 %v374, %v402
      %404 = vmatmul.bf16.gmra.mxu0 %v354
      %v405 = vpop.f32.mrf.mxu0
      %v406 = vadd.f32 %v377, %v405
      %v407 = vpop.f32.mrf.mxu0
      %v408 = vadd.f32 %v379, %v407
      %409 = vmatmul.bf16.gmra.mxu0 %v357
      %v410 = vpop.f32.mrf.mxu0
      %v411 = vadd.f32 %v382, %v410
      %v412 = vpop.f32.mrf.mxu0
      %v413 = vadd.f32 %v384, %v412
      %414 = vmatmul.bf16.gmra.mxu0 %v360
      %v415 = vpop.f32.mrf.mxu0
      %v416 = vadd.f32 %v387, %v415
      %v417 = vpop.f32.mrf.mxu0
      %v418 = vadd.f32 %v389, %v417
      %419 = vdwg.mxu0
      %v420 = vpack.c.bf16 %v401, %v401
      %v421 = vpack.c.bf16 %v403, %v403
      %v422 = vpack.c.bf16 %v406, %v406
      %v423 = vpack.c.bf16 %v408, %v408
      %v424 = vpack.c.bf16 %v411, %v411
      %v425 = vpack.c.bf16 %v413, %v413
      %v426 = vpack.c.bf16 %v416, %v416
      %v427 = vpack.c.bf16 %v418, %v418
      %428 = vst [vmem:[%s226] sm:$0xf] %v420
      %429 = vst [vmem:[%s226 + $0x4] sm:$0xf] %v421
      %430 = vst [vmem:[%s226 + $0x8] sm:$0xf] %v422
      %431 = vst [vmem:[%s226 + $0xc] sm:$0xf] %v423
      %432 = vst [vmem:[%s226 + $0x10] sm:$0xf] %v424
      %433 = vst [vmem:[%s226 + $0x14] sm:$0xf] %v425
      %434 = vst [vmem:[%s226 + $0x18] sm:$0xf] %v426
      %435 = vst [vmem:[%s226 + $0x1c] sm:$0xf] %v427
      %s436 = smul.u32 8, %s18
      %p437 = scmp.lt.s32.totalorder %s436, 15
      %s438 = scalar_select %p437, %s436, 15
      %p439 = scmp.lt.s32.totalorder %s19, 0
      %s440 = scalar_select %p439, %s19, 0
      %s441 = sadd.s32 %s440, %s438
      %s442 = smul.addr %s441, 4
      %s443 = scalar_lea.vmem %s3, %s442
      // Predicated region
      $region33: #{generator_forward.12} parent=31 // pred_check
        %p444 = pneg %p124
      $region34: #{generator_forward.12} parent=31 // pred_check_branch
        %446 = sbr.rel (%p444) target = $region36
      $region35: #{generator_forward.12} parent=31 // pred_region
        %s447 = smul.u32 8, %s18
      $region36: #{generator_forward.12} parent=31 // pred_fallthru
        _
    $region32: #{generator_forward.12} parent=5 // pred_fallthru
      _
    %p448 = scmp.le.s32.totalorder 2, %s9
    // Predicated region
    $region37: #{generator_forward.12} parent=5 // pred_check
      %p449 = pneg %p448
    $region38: #{generator_forward.12} parent=5 // pred_check_branch
      %451 = sbr.rel (%p449) target = $region40
    $region39: #{generator_forward.12} parent=5 // pred_region
      %s452 = ssub.s32 %s9, 2
      // Predicated region
      $region41: #{generator_forward.12} parent=39 // pred_check
        %p453 = pneg %p130
      $region42: #{generator_forward.12} parent=39 // pred_check_branch
        %455 = sbr.rel (%p453) target = $region44
      $region43: #{generator_forward.12} parent=39 // pred_region
        %s456 = smul.u32 8, %s20
        %p457 = scmp.lt.s32.totalorder %s456, 15
        %s458 = scalar_select %p457, %s456, 15
        %p459 = scmp.lt.s32.totalorder %s21, 0
        %s460 = scalar_select %p459, %s21, 0
        %s461 = sadd.s32 %s460, %s458
        %s462 = smul.addr %s461, 4
        %s463 = scalar_lea.vmem %s3, %s462
      $region44: #{generator_forward.12} parent=39 // pred_fallthru
        _
    $region40: #{generator_forward.12} parent=5 // pred_fallthru
      _
  $region6: #{generator_forward.12} parent=0 // loop_footer
    %s13 = sadd.s32 1, %s9
  $region7: #{generator_forward.12} parent=0 // loop_footer_branch
    %8 = sbr.rel target = $region3
  $region8: #{generator_forward.12} parent=0 // loop_exit
    _

// kernel: generator_forward.13
$region0: #{generator_forward.13}
  #allocation0 [shape = 'u32[]', space=smem, size = 0x4, offset = 0x4, fixed_abs, tag = 'smem constant byte address 0x4 - core index']
  #allocation1 [shape = 'u32[72,128]{1,0:T(1,128)}', space=vmem, size = 0x9000, scoped, tag = 'internal scratch']
  %s0 = inlined_call_operand.vmem [shape: bf16[512,36], index: 0, kind: input, shape index: {}]
  %s1 = inlined_call_operand.vmem [shape: bf16[36,128], index: 1, kind: input, shape index: {}]
  %s2 = inlined_call_operand.vmem [shape: f32[1,128], index: 2, kind: input, shape index: {}]
  %s3 = inlined_call_operand.vmem [shape: bf16[512,128], index: 3, kind: output, shape index: {}]
  %s4 = sld [smem:[#allocation0]]
  $region45: #{generator_forward.13} parent=0
    _
  %s6 = ssub.s32 1, %s4
  %s7 = scalar_select 0, %s6, %s4
  loop: start=0, step=1, limit=4
  $region2: #{generator_forward.13} parent=0 // loop_pre_header
    _
  $region3: #{generator_forward.13} parent=0 // loop_header
    %s9 = sphi 0, %s13
    %p10 = scmp.ge.s32.totalorder %s9, 4
    %s16 = sphi 0, %s28
    %s17 = sphi 0, %s24
    %s18 = sphi 0, %s16
    %s19 = sphi 0, %s17
    %s20 = sphi 0, %s18
    %s21 = sphi 0, %s19
    %s31 = sphi 0, %s33
    %s34 = sphi 0, %s31
    %s35 = sphi 0, %s34
    %s51 = sphi 0, %s35
    %s57 = sphi 0, %s59
    %s60 = sphi 0, %s57
    %s61 = sphi 0, %s60
    %s77 = sphi 0, %s61
    %s83 = sphi 0, %s85
    %s86 = sphi 0, %s83
    %s87 = sphi 0, %s86
    %s103 = sphi 0, %s87
    %s111 = sphi 0, %s113
    %s114 = sphi 0, %s111
    %s115 = sphi 0, %s114
    %s131 = sphi 0, %s115
  $region4: #{generator_forward.13} parent=0 // loop_header_branch
    %12 = sbr.rel (%p10) target = $region8
  $region5: #{generator_forward.13} parent=0 // loop_body
    %s14 = ssub.s32 %s9, 1
    %s15 = ssub.s32 %s9, 2
    %s22 = sadd.s32 1, %s17
    %p23 = scmp.ge.s32.totalorder %s22, 1
    %s24 = scalar_select %p23, 0, %s22
    %s25 = sadd.s32 1, %s16
    %s26 = scalar_select %p23, %s25, %s16
    %p27 = scmp.ge.s32.totalorder %s26, 2
    %s28 = scalar_select %p27, 0, %s26
    %s29 = ssub.s32 %s16, %s28
    %p30 = scmp.eq.s32.totalorder %s29, 0
    %s32 = sadd.s32 %s31, 1
    %s33 = scalar_select %p30, %s31, %s32
    %p36 = pneg %p30
    %p37 = scmp.eq.s32.totalorder %s9, 1
    %p38 = por %p36, %p37
    %p39 = scmp.ne.s32.totalorder %s31, %s34
    %p40 = scmp.eq.s32.totalorder %s9, 0
    %p41 = por %p39, %p40
    %p42 = scmp.ne.s32.totalorder %s31, %s34
    %p43 = scmp.eq.s32.totalorder %s14, 1
    %p44 = por %p42, %p43
    %p45 = scmp.ne.s32.totalorder %s34, %s35
    %p46 = scmp.eq.s32.totalorder %s14, 0
    %p47 = por %p45, %p46
    %p48 = scmp.ne.s32.totalorder %s34, %s35
    %p49 = scmp.eq.s32.totalorder %s15, 1
    %p50 = por %p48, %p49
    %p52 = scmp.ne.s32.totalorder %s35, %s51
    %p53 = scmp.eq.s32.totalorder %s15, 0
    %p54 = por %p52, %p53
    %s55 = ssub.s32 %s17, %s24
    %p56 = scmp.eq.s32.totalorder %s55, 0
    %s58 = sadd.s32 %s57, 1
    %s59 = scalar_select %p56, %s57, %s58
    %p62 = pneg %p56
    %p63 = scmp.eq.s32.totalorder %s9, 1
    %p64 = por %p62, %p63
    %p65 = scmp.ne.s32.totalorder %s57, %s60
    %p66 = scmp.eq.s32.totalorder %s9, 0
    %p67 = por %p65, %p66
    %p68 = scmp.ne.s32.totalorder %s57, %s60
    %p69 = scmp.eq.s32.totalorder %s14, 1
    %p70 = por %p68, %p69
    %p71 = scmp.ne.s32.totalorder %s60, %s61
    %p72 = scmp.eq.s32.totalorder %s14, 0
    %p73 = por %p71, %p72
    %p74 = scmp.ne.s32.totalorder %s60, %s61
    %p75 = scmp.eq.s32.totalorder %s15, 1
    %p76 = por %p74, %p75
    %p78 = scmp.ne.s32.totalorder %s61, %s77
    %p79 = scmp.eq.s32.totalorder %s15, 0
    %p80 = por %p78, %p79
    %s81 = ssub.s32 %s17, %s24
    %p82 = scmp.eq.s32.totalorder %s81, 0
    %s84 = sadd.s32 %s83, 1
    %s85 = scalar_select %p82, %s83, %s84
    %p88 = pneg %p82
    %p89 = scmp.eq.s32.totalorder %s9, 1
    %p90 = por %p88, %p89
    %p91 = scmp.ne.s32.totalorder %s83, %s86
    %p92 = scmp.eq.s32.totalorder %s9, 0
    %p93 = por %p91, %p92
    %p94 = scmp.ne.s32.totalorder %s83, %s86
    %p95 = scmp.eq.s32.totalorder %s14, 1
    %p96 = por %p94, %p95
    %p97 = scmp.ne.s32.totalorder %s86, %s87
    %p98 = scmp.eq.s32.totalorder %s14, 0
    %p99 = por %p97, %p98
    %p100 = scmp.ne.s32.totalorder %s86, %s87
    %p101 = scmp.eq.s32.totalorder %s15, 1
    %p102 = por %p100, %p101
    %p104 = scmp.ne.s32.totalorder %s87, %s103
    %p105 = scmp.eq.s32.totalorder %s15, 0
    %p106 = por %p104, %p105
    %s107 = ssub.s32 %s16, %s28
    %s108 = ssub.s32 %s17, %s24
    %s109 = sor.u32 %s107, %s108
    %p110 = scmp.eq.s32.totalorder %s109, 0
    %s112 = sadd.s32 %s111, 1
    %s113 = scalar_select %p110, %s111, %s112
    %p116 = pneg %p110
    %p117 = scmp.eq.s32.totalorder %s9, 1
    %p118 = por %p116, %p117
    %p119 = scmp.ne.s32.totalorder %s111, %s114
    %p120 = scmp.eq.s32.totalorder %s9, 0
    %p121 = por %p119, %p120
    %p122 = scmp.ne.s32.totalorder %s111, %s114
    %p123 = scmp.eq.s32.totalorder %s14, 1
    %p124 = por %p122, %p123
    %p125 = scmp.ne.s32.totalorder %s114, %s115
    %p126 = scmp.eq.s32.totalorder %s14, 0
    %p127 = por %p125, %p126
    %p128 = scmp.ne.s32.totalorder %s114, %s115
    %p129 = scmp.eq.s32.totalorder %s15, 1
    %p130 = por %p128, %p129
    %p132 = scmp.ne.s32.totalorder %s115, %s131
    %p133 = scmp.eq.s32.totalorder %s15, 0
    %p134 = por %p132, %p133
    %p135 = scmp.le.s32.totalorder 1, %s9
    %p136 = scmp.lt.s32.totalorder %s9, 3
    %p137 = pnand %p135, %p136
    %p138 = pneg %p137
    // Predicated region
    $region9: #{generator_forward.13} parent=5 // pred_check
      _
    $region10: #{generator_forward.13} parent=5 // pred_check_branch
      %140 = sbr.rel (%p137) target = $region12
    $region11: #{generator_forward.13} parent=5 // pred_region
      %s141 = ssub.s32 %s9, 1
      // Predicated region
      $region13: #{generator_forward.13} parent=11 // pred_check
        %p142 = pneg %p73
      $region14: #{generator_forward.13} parent=11 // pred_check_branch
        %144 = sbr.rel (%p142) target = $region16
      $region15: #{generator_forward.13} parent=11 // pred_region
        %p145 = scmp.lt.s32.totalorder %s19, 0
        %s146 = scalar_select %p145, %s19, 0
        %s147 = smul.addr %s146, 4
        %s148 = scalar_lea.vmem %s1, %s147
      $region16: #{generator_forward.13} parent=11 // pred_fallthru
        _
      // Predicated region
      $region17: #{generator_forward.13} parent=11 // pred_check
        %p149 = pneg %p99
      $region18: #{generator_forward.13} parent=11 // pred_check_branch
        %151 = sbr.rel (%p149) target = $region20
      $region19: #{generator_forward.13} parent=11 // pred_region
        %p152 = scmp.lt.s32.totalorder %s19, 0
        %s153 = scalar_select %p152, %s19, 0
        %s154 = scalar_lea.vmem %s2, %s153
      $region20: #{generator_forward.13} parent=11 // pred_fallthru
        _
    $region12: #{generator_forward.13} parent=5 // pred_fallthru
      _
    %p155 = scmp.lt.s32.totalorder %s9, 2
    // Predicated region
    $region21: #{generator_forward.13} parent=5 // pred_check
      %p156 = pneg %p155
    $region22: #{generator_forward.13} parent=5 // pred_check_branch
      %158 = sbr.rel (%p156) target = $region24
    $region23: #{generator_forward.13} parent=5 // pred_region
      // Predicated region
      $region25: #{generator_forward.13} parent=23 // pred_check
        %p159 = pneg %p41
      $region26: #{generator_forward.13} parent=23 // pred_check_branch
        %161 = sbr.rel (%p159) target = $region28
      $region27: #{generator_forward.13} parent=23 // pred_region
        %s162 = smul.u32 32, %s16
        %p163 = scmp.lt.s32.totalorder %s162, 63
        %s164 = scalar_select %p163, %s162, 63
        %s165 = smul.addr %s164, 4
        %s166 = scalar_lea.vmem %s0, %s165
        %s167 = smul.u32 32, %s16
      $region28: #{generator_forward.13} parent=23 // pred_fallthru
        _
    $region24: #{generator_forward.13} parent=5 // pred_fallthru
      _
    %p168 = scmp.le.s32.totalorder 1, %s9
    %p169 = scmp.lt.s32.totalorder %s9, 3
    %p170 = pnand %p168, %p169
    %p171 = pneg %p170
    // Predicated region
    $region29: #{generator_forward.13} parent=5 // pred_check
      _
    $region30: #{generator_forward.13} parent=5 // pred_check_branch
      %173 = sbr.rel (%p170) target = $region32
    $region31: #{generator_forward.13} parent=5 // pred_region
      %s174 = ssub.s32 %s9, 1
      %s175 = smul.u32 32, %s18
      %p176 = scmp.lt.s32.totalorder %s175, 63
      %s177 = scalar_select %p176, %s175, 63
      %s178 = smul.addr %s177, 4
      %s179 = scalar_lea.vmem %s0, %s178
      %p180 = pneg %p47
      %p181 = pneg %p44
      %p182 = scmp.lt.s32.totalorder %s19, 0
      %s183 = scalar_select %p182, %s19, 0
      %s184 = smul.addr %s183, 4
      %s185 = scalar_lea.vmem %s1, %s184
      %p186 = pneg %p73
      %p187 = pneg %p70
      %p188 = scmp.lt.s32.totalorder %s19, 0
      %s189 = scalar_select %p188, %s19, 0
      %s190 = scalar_lea.vmem %s2, %s189
      %p191 = pneg %p99
      %p192 = pneg %p96
      %p193 = pneg %p127
      %p194 = pneg %p124
      %s195 = smul.u32 32, %s18
      %p196 = scmp.lt.s32.totalorder %s195, 63
      %s197 = scalar_select %p196, %s195, 63
      %p198 = scmp.lt.s32.totalorder %s19, 0
      %s199 = scalar_select %p198, %s19, 0
      %s200 = sadd.s32 %s199, %s197
      %s201 = smul.addr %s200, 4
      %s202 = scalar_lea.vmem %s3, %s201
      %s203 = smul.u32 32, %s18
      %p204 = scmp.lt.s32.totalorder %s203, 63
      %s205 = scalar_select %p204, %s203, 63
      %s206 = smul.addr %s205, 4
      %s207 = scalar_lea.vmem %s0, %s206
      %s208 = smul.u32 32, %s18
      %p209 = scmp.lt.s32.totalorder %s19, 0
      %s210 = scalar_select %p209, %s19, 0
      %s211 = smul.addr %s210, 4
      %s212 = scalar_lea.vmem %s1, %s211
      %p213 = scmp.lt.s32.totalorder %s19, 0
      %s214 = scalar_select %p213, %s19, 0
      %s215 = scalar_lea.vmem %s2, %s214
      %s216 = smul.u32 32, %s18
      %p217 = scmp.lt.s32.totalorder %s216, 63
      %s218 = scalar_select %p217, %s216, 63
      %p219 = scmp.lt.s32.totalorder %s19, 0
      %s220 = scalar_select %p219, %s19, 0
      %s221 = sadd.s32 %s220, %s218
      %s222 = smul.addr %s221, 4
      %s223 = scalar_lea.vmem %s3, %s222
      %s224 = smul.u32 32, %s18
      %v226 = vld [vmem:[%s207] sm:$0xf]
      %v227 = vld [vmem:[%s207 + $0x4] sm:$0xf]
      %v228 = vld [vmem:[%s207 + $0x8] sm:$0xf]
      %v229 = vld [vmem:[%s207 + $0xc] sm:$0xf]
      %v230 = vld [vmem:[%s207 + $0x10] sm:$0xf]
      %v231 = vld [vmem:[%s207 + $0x14] sm:$0xf]
      %v232 = vld [vmem:[%s207 + $0x18] sm:$0xf]
      %v233 = vld [vmem:[%s207 + $0x1c] sm:$0xf]
      %v234 = vld [vmem:[%s207 + $0x20] sm:$0xf]
      %v235 = vld [vmem:[%s207 + $0x24] sm:$0xf]
      %v236 = vld [vmem:[%s207 + $0x28] sm:$0xf]
      %v237 = vld [vmem:[%s207 + $0x2c] sm:$0xf]
      %v238 = vld [vmem:[%s207 + $0x30] sm:$0xf]
      %v239 = vld [vmem:[%s207 + $0x34] sm:$0xf]
      %v240 = vld [vmem:[%s207 + $0x38] sm:$0xf]
      %v241 = vld [vmem:[%s207 + $0x3c] sm:$0xf]
      %v242 = vld [vmem:[%s207 + $0x40] sm:$0xf]
      %v243 = vld [vmem:[%s207 + $0x44] sm:$0xf]
      %v244 = vld [vmem:[%s207 + $0x48] sm:$0xf]
      %v245 = vld [vmem:[%s207 + $0x4c] sm:$0xf]
      %v246 = vld [vmem:[%s207 + $0x50] sm:$0xf]
      %v247 = vld [vmem:[%s207 + $0x54] sm:$0xf]
      %v248 = vld [vmem:[%s207 + $0x58] sm:$0xf]
      %v249 = vld [vmem:[%s207 + $0x5c] sm:$0xf]
      %v250 = vld [vmem:[%s207 + $0x60] sm:$0xf]
      %v251 = vld [vmem:[%s207 + $0x64] sm:$0xf]
      %v252 = vld [vmem:[%s207 + $0x68] sm:$0xf]
      %v253 = vld [vmem:[%s207 + $0x6c] sm:$0xf]
      %v254 = vld [vmem:[%s207 + $0x70] sm:$0xf]
      %v255 = vld [vmem:[%s207 + $0x74] sm:$0xf]
      %v256 = vld [vmem:[%s207 + $0x78] sm:$0xf]
      %v257 = vld [vmem:[%s207 + $0x7c] sm:$0xf]
      %v258 = vld [vmem:[%s212] sm:$0xf]
      %v259 = vld [vmem:[%s212 + $0x4] sm:$0xf]
      %v260 = vld [vmem:[%s212 + $0x8] sm:$0xf]
      %v261 = vld [vmem:[%s212 + $0xc] sm:$0xf]
      %v262 = vld [vmem:[%s212 + $0x10] sm:$0x3]
      %v263 = vld [vmem:[%s215] sm:$0x1]
      %v265 = vperm.slane %v263, 0
      %v299 = vunpack.c.l.b16 %v226
      %v300 = vunpack.c.l.b16 %v227
      %v301 = vunpack.c.l.b16 %v228
      %v302 = vunpack.c.l.b16 %v229
      %v303 = vunpack.c.l.b16 %v230
      %v304 = vunpack.c.l.b16 %v231
      %v305 = vunpack.c.l.b16 %v232
      %v306 = vunpack.c.l.b16 %v233
      %v307 = vunpack.c.l.b16 %v234
      %v308 = vunpack.c.l.b16 %v235
      %v309 = vunpack.c.l.b16 %v236
      %v310 = vunpack.c.l.b16 %v237
      %v311 = vunpack.c.l.b16 %v238
      %v312 = vunpack.c.l.b16 %v239
      %v313 = vunpack.c.l.b16 %v240
      %v314 = vunpack.c.l.b16 %v241
      %v315 = vunpack.c.l.b16 %v242
      %v316 = vunpack.c.l.b16 %v243
      %v317 = vunpack.c.l.b16 %v244
      %v318 = vunpack.c.l.b16 %v245
      %v319 = vunpack.c.l.b16 %v246
      %v320 = vunpack.c.l.b16 %v247
      %v321 = vunpack.c.l.b16 %v248
      %v322 = vunpack.c.l.b16 %v249
      %v323 = vunpack.c.l.b16 %v250
      %v324 = vunpack.c.l.b16 %v251
      %v325 = vunpack.c.l.b16 %v252
      %v326 = vunpack.c.l.b16 %v253
      %v327 = vunpack.c.l.b16 %v254
      %v328 = vunpack.c.l.b16 %v255
      %v329 = vunpack.c.l.b16 %v256
      %v330 = vunpack.c.l.b16 %v257
      %v331 = vpack.c.b16 %v300, %v299
      %v332 = vpack.c.b16 %v302, %v301
      %v333 = vpack.c.b16 %v304, %v303
      %v334 = vpack.c.b16 %v306, %v305
      %v335 = vpack.c.b16 %v308, %v307
      %v336 = vpack.c.b16 %v310, %v309
      %v337 = vpack.c.b16 %v312, %v311
      %v338 = vpack.c.b16 %v314, %v313
      %v339 = vpack.c.b16 %v316, %v315
      %v340 = vpack.c.b16 %v318, %v317
      %v341 = vpack.c.b16 %v320, %v319
      %v342 = vpack.c.b16 %v322, %v321
      %v343 = vpack.c.b16 %v324, %v323
      %v344 = vpack.c.b16 %v326, %v325
      %v345 = vpack.c.b16 %v328, %v327
      %v346 = vpack.c.b16 %v330, %v329
      %v352 = vunpack.c.l.b16 %v258
      %v353 = vunpack.c.l.b16 %v259
      %v354 = vunpack.c.l.b16 %v260
      %v355 = vunpack.c.l.b16 %v261
      %v356 = vunpack.c.l.b16 %v262
      %v357 = vpack.c.b16 %v353, %v352
      %v358 = vpack.c.b16 %v355, %v354
      %v359 = vpack.c.b16 %v356, %v356
      %vm362 = vcmask 293888
      %v364 = vsel %vm362, %v331, 0
      %v367 = vsel %vm362, %v332, 0
      %v370 = vsel %vm362, %v333, 0
      %v373 = vsel %vm362, %v334, 0
      %v376 = vsel %vm362, %v335, 0
      %v379 = vsel %vm362, %v336, 0
      %v382 = vsel %vm362, %v337, 0
      %v385 = vsel %vm362, %v338, 0
      %v388 = vsel %vm362, %v339, 0
      %v391 = vsel %vm362, %v340, 0
      %v394 = vsel %vm362, %v341, 0
      %v397 = vsel %vm362, %v342, 0
      %v400 = vsel %vm362, %v343, 0
      %v403 = vsel %vm362, %v344, 0
      %v406 = vsel %vm362, %v345, 0
      %v409 = vsel %vm362, %v346, 0
      %vm411 = vcmask 1041408
      %v413 = vsel %vm411, %v359, 0
      %415 = vmatpush.bf16.msra.mxu0 0
      %416 = vmatpush.bf16.msra.mxu0 0
      %417 = vmatpush.bf16.msra.mxu0 0
      %418 = vmatpush.bf16.msra.mxu0 0
      %419 = vmatpush.bf16.msra.mxu0 0
      %420 = vmatpush.bf16.msra.mxu0 %v413
      %421 = vmatpush.bf16.msra.mxu0 %v358
      %422 = vmatpush.bf16.msra.mxu0 %v357
      %423 = vmatmul.bf16.gmra.mxu0 %v364
      %v424 = vpop.f32.mrf.mxu0
      %v425 = vadd.f32 %v265, %v424
      %v426 = vpop.f32.mrf.mxu0
      %v427 = vadd.f32 %v265, %v426
      %428 = vmatmul.bf16.gmra.mxu0 %v367
      %v429 = vpop.f32.mrf.mxu0
      %v430 = vadd.f32 %v265, %v429
      %v431 = vpop.f32.mrf.mxu0
      %v432 = vadd.f32 %v265, %v431
      %433 = vmatmul.bf16.gmra.mxu0 %v370
      %v434 = vpop.f32.mrf.mxu0
      %v435 = vadd.f32 %v265, %v434
      %v436 = vpop.f32.mrf.mxu0
      %v437 = vadd.f32 %v265, %v436
      %438 = vmatmul.bf16.gmra.mxu0 %v373
      %v439 = vpop.f32.mrf.mxu0
      %v440 = vadd.f32 %v265, %v439
      %v441 = vpop.f32.mrf.mxu0
      %v442 = vadd.f32 %v265, %v441
      %443 = vmatmul.bf16.gmra.mxu0 %v376
      %v444 = vpop.f32.mrf.mxu0
      %v445 = vadd.f32 %v265, %v444
      %v446 = vpop.f32.mrf.mxu0
      %v447 = vadd.f32 %v265, %v446
      %448 = vmatmul.bf16.gmra.mxu0 %v379
      %v449 = vpop.f32.mrf.mxu0
      %v450 = vadd.f32 %v265, %v449
      %v451 = vpop.f32.mrf.mxu0
      %v452 = vadd.f32 %v265, %v451
      %453 = vmatmul.bf16.gmra.mxu0 %v382
      %v454 = vpop.f32.mrf.mxu0
      %v455 = vadd.f32 %v265, %v454
      %v456 = vpop.f32.mrf.mxu0
      %v457 = vadd.f32 %v265, %v456
      %458 = vmatmul.bf16.gmra.mxu0 %v385
      %v459 = vpop.f32.mrf.mxu0
      %v460 = vadd.f32 %v265, %v459
      %v461 = vpop.f32.mrf.mxu0
      %v462 = vadd.f32 %v265, %v461
      %463 = vmatmul.bf16.gmra.mxu0 %v388
      %v464 = vpop.f32.mrf.mxu0
      %v465 = vadd.f32 %v265, %v464
      %v466 = vpop.f32.mrf.mxu0
      %v467 = vadd.f32 %v265, %v466
      %468 = vmatmul.bf16.gmra.mxu0 %v391
      %v469 = vpop.f32.mrf.mxu0
      %v470 = vadd.f32 %v265, %v469
      %v471 = vpop.f32.mrf.mxu0
      %v472 = vadd.f32 %v265, %v471
      %473 = vmatmul.bf16.gmra.mxu0 %v394
      %v474 = vpop.f32.mrf.mxu0
      %v475 = vadd.f32 %v265, %v474
      %v476 = vpop.f32.mrf.mxu0
      %v477 = vadd.f32 %v265, %v476
      %478 = vmatmul.bf16.gmra.mxu0 %v397
      %v479 = vpop.f32.mrf.mxu0
      %v480 = vadd.f32 %v265, %v479
      %v481 = vpop.f32.mrf.mxu0
      %v482 = vadd.f32 %v265, %v481
      %483 = vmatmul.bf16.gmra.mxu0 %v400
      %v484 = vpop.f32.mrf.mxu0
      %v485 = vadd.f32 %v265, %v484
      %v486 = vpop.f32.mrf.mxu0
      %v487 = vadd.f32 %v265, %v486
      %488 = vmatmul.bf16.gmra.mxu0 %v403
      %v489 = vpop.f32.mrf.mxu0
      %v490 = vadd.f32 %v265, %v489
      %v491 = vpop.f32.mrf.mxu0
      %v492 = vadd.f32 %v265, %v491
      %493 = vmatmul.bf16.gmra.mxu0 %v406
      %v494 = vpop.f32.mrf.mxu0
      %v495 = vadd.f32 %v265, %v494
      %v496 = vpop.f32.mrf.mxu0
      %v497 = vadd.f32 %v265, %v496
      %498 = vmatmul.bf16.gmra.mxu0 %v409
      %v499 = vpop.f32.mrf.mxu0
      %v500 = vadd.f32 %v265, %v499
      %v501 = vpop.f32.mrf.mxu0
      %v502 = vadd.f32 %v265, %v501
      %503 = vdwg.mxu0
      %v504 = vpack.c.bf16 %v425, %v425
      %v505 = vpack.c.bf16 %v427, %v427
      %v506 = vpack.c.bf16 %v430, %v430
      %v507 = vpack.c.bf16 %v432, %v432
      %v508 = vpack.c.bf16 %v435, %v435
      %v509 = vpack.c.bf16 %v437, %v437
      %v510 = vpack.c.bf16 %v440, %v440
      %v511 = vpack.c.bf16 %v442, %v442
      %v512 = vpack.c.bf16 %v445, %v445
      %v513 = vpack.c.bf16 %v447, %v447
      %v514 = vpack.c.bf16 %v450, %v450
      %v515 = vpack.c.bf16 %v452, %v452
      %v516 = vpack.c.bf16 %v455, %v455
      %v517 = vpack.c.bf16 %v457, %v457
      %v518 = vpack.c.bf16 %v460, %v460
      %v519 = vpack.c.bf16 %v462, %v462
      %v520 = vpack.c.bf16 %v465, %v465
      %v521 = vpack.c.bf16 %v467, %v467
      %v522 = vpack.c.bf16 %v470, %v470
      %v523 = vpack.c.bf16 %v472, %v472
      %v524 = vpack.c.bf16 %v475, %v475
      %v525 = vpack.c.bf16 %v477, %v477
      %v526 = vpack.c.bf16 %v480, %v480
      %v527 = vpack.c.bf16 %v482, %v482
      %v528 = vpack.c.bf16 %v485, %v485
      %v529 = vpack.c.bf16 %v487, %v487
      %v530 = vpack.c.bf16 %v490, %v490
      %v531 = vpack.c.bf16 %v492, %v492
      %v532 = vpack.c.bf16 %v495, %v495
      %v533 = vpack.c.bf16 %v497, %v497
      %v534 = vpack.c.bf16 %v500, %v500
      %v535 = vpack.c.bf16 %v502, %v502
      %536 = vst [vmem:[%s223] sm:$0xf] %v504
      %537 = vst [vmem:[%s223 + $0x4] sm:$0xf] %v505
      %538 = vst [vmem:[%s223 + $0x8] sm:$0xf] %v506
      %539 = vst [vmem:[%s223 + $0xc] sm:$0xf] %v507
      %540 = vst [vmem:[%s223 + $0x10] sm:$0xf] %v508
      %541 = vst [vmem:[%s223 + $0x14] sm:$0xf] %v509
      %542 = vst [vmem:[%s223 + $0x18] sm:$0xf] %v510
      %543 = vst [vmem:[%s223 + $0x1c] sm:$0xf] %v511
      %544 = vst [vmem:[%s223 + $0x20] sm:$0xf] %v512
      %545 = vst [vmem:[%s223 + $0x24] sm:$0xf] %v513
      %546 = vst [vmem:[%s223 + $0x28] sm:$0xf] %v514
      %547 = vst [vmem:[%s223 + $0x2c] sm:$0xf] %v515
      %548 = vst [vmem:[%s223 + $0x30] sm:$0xf] %v516
      %549 = vst [vmem:[%s223 + $0x34] sm:$0xf] %v517
      %550 = vst [vmem:[%s223 + $0x38] sm:$0xf] %v518
      %551 = vst [vmem:[%s223 + $0x3c] sm:$0xf] %v519
      %552 = vst [vmem:[%s223 + $0x40] sm:$0xf] %v520
      %553 = vst [vmem:[%s223 + $0x44] sm:$0xf] %v521
      %554 = vst [vmem:[%s223 + $0x48] sm:$0xf] %v522
      %555 = vst [vmem:[%s223 + $0x4c] sm:$0xf] %v523
      %556 = vst [vmem:[%s223 + $0x50] sm:$0xf] %v524
      %557 = vst [vmem:[%s223 + $0x54] sm:$0xf] %v525
      %558 = vst [vmem:[%s223 + $0x58] sm:$0xf] %v526
      %559 = vst [vmem:[%s223 + $0x5c] sm:$0xf] %v527
      %560 = vst [vmem:[%s223 + $0x60] sm:$0xf] %v528
      %561 = vst [vmem:[%s223 + $0x64] sm:$0xf] %v529
      %562 = vst [vmem:[%s223 + $0x68] sm:$0xf] %v530
      %563 = vst [vmem:[%s223 + $0x6c] sm:$0xf] %v531
      %564 = vst [vmem:[%s223 + $0x70] sm:$0xf] %v532
      %565 = vst [vmem:[%s223 + $0x74] sm:$0xf] %v533
      %566 = vst [vmem:[%s223 + $0x78] sm:$0xf] %v534
      %567 = vst [vmem:[%s223 + $0x7c] sm:$0xf] %v535
      %s568 = smul.u32 32, %s18
      %p569 = scmp.lt.s32.totalorder %s568, 63
      %s570 = scalar_select %p569, %s568, 63
      %p571 = scmp.lt.s32.totalorder %s19, 0
      %s572 = scalar_select %p571, %s19, 0
      %s573 = sadd.s32 %s572, %s570
      %s574 = smul.addr %s573, 4
      %s575 = scalar_lea.vmem %s3, %s574
      // Predicated region
      $region33: #{generator_forward.13} parent=31 // pred_check
        %p576 = pneg %p124
      $region34: #{generator_forward.13} parent=31 // pred_check_branch
        %578 = sbr.rel (%p576) target = $region36
      $region35: #{generator_forward.13} parent=31 // pred_region
        %s579 = smul.u32 32, %s18
      $region36: #{generator_forward.13} parent=31 // pred_fallthru
        _
    $region32: #{generator_forward.13} parent=5 // pred_fallthru
      _
    %p580 = scmp.le.s32.totalorder 2, %s9
    // Predicated region
    $region37: #{generator_forward.13} parent=5 // pred_check
      %p581 = pneg %p580
    $region38: #{generator_forward.13} parent=5 // pred_check_branch
      %583 = sbr.rel (%p581) target = $region40
    $region39: #{generator_forward.13} parent=5 // pred_region
      %s584 = ssub.s32 %s9, 2
      // Predicated region
      $region41: #{generator_forward.13} parent=39 // pred_check
        %p585 = pneg %p130
      $region42: #{generator_forward.13} parent=39 // pred_check_branch
        %587 = sbr.rel (%p585) target = $region44
      $region43: #{generator_forward.13} parent=39 // pred_region
        %s588 = smul.u32 32, %s20
        %p589 = scmp.lt.s32.totalorder %s588, 63
        %s590 = scalar_select %p589, %s588, 63
        %p591 = scmp.lt.s32.totalorder %s21, 0
        %s592 = scalar_select %p591, %s21, 0
        %s593 = sadd.s32 %s592, %s590
        %s594 = smul.addr %s593, 4
        %s595 = scalar_lea.vmem %s3, %s594
      $region44: #{generator_forward.13} parent=39 // pred_fallthru
        _
    $region40: #{generator_forward.13} parent=5 // pred_fallthru
      _
  $region6: #{generator_forward.13} parent=0 // loop_footer
    %s13 = sadd.s32 1, %s9
  $region7: #{generator_forward.13} parent=0 // loop_footer_branch
    %8 = sbr.rel target = $region3
  $region8: #{generator_forward.13} parent=0 // loop_exit
    _

</llo_original>
